<compile_context>
chip_gen: v6e
topology: v6e:2x2x1
jax: 0.10.0
libtpu: 0.0.40
codegen_flags: <defaults>
</compile_context>

<pallas_src>
import functools

import jax
import jax.numpy as jnp
from jax.experimental import pallas as pl
from jax.experimental.pallas import tpu as pltpu


def _round_up(n, m):
    return (n + m - 1) // m * m


def gru_fc_kernel(x_ref, wx_ref, bx_ref, wh_ref, bhn_ref, fcw_ref, fcb_ref,
                  out_ref, gx_ref, h_ref, *, t_valid, t_padded):
    """One grid step == Tc timesteps of the GRU recurrence for one batch block.

    x_ref  : (Tc, Bb, Ik)   time-major input chunk (Ik = I rounded to 8, NOT 128)
    wx_ref : (Ik, 3*Hp)     x-side gate weights, column blocks [r, z, n_x] (f32)
    bx_ref : (1, 3*Hp)      folded biases [b_ir+b_hr, b_iz+b_hz, b_in]
    wh_ref : (Hp, 3*Hp)     h-side gate weights, column blocks [r, z, n_h] (bf16)
    bhn_ref: (1, Hp)        b_hn (kept separate: n = tanh(nx + r*(nh + b_hn)))
    fcw_ref: (Hp, 128)      fc.weight^T, lane-padded
    fcb_ref: (1, 128)       fc.bias, lane-padded
    out_ref: (Bb, 128)      output block (written on the last time chunk)
    gx_ref : (Tc, Bb, 3*Hp) VMEM scratch: precomputed x-gates for the chunk
    h_ref  : (Bb, Hp)       VMEM scratch carrying the hidden state across chunks
    """
    ci = pl.program_id(1)
    tc, bb, _ = x_ref.shape
    hp = h_ref.shape[-1]

    @pl.when(ci == 0)
    def _():
        h_ref[...] = jnp.zeros_like(h_ref)

    # Chunk-level x-projection: one matmul for all Tc timesteps (overlaps the x DMA),
    # with the r/z/n_x biases folded in via the (1, 3Hp) bias row broadcast.
    x2 = x_ref[...].reshape(tc * bb, x_ref.shape[2])
    gx = jnp.dot(x2, wx_ref[...], preferred_element_type=jnp.float32) + bx_ref[...]
    gx_ref[...] = gx.reshape(tc, bb, 3 * hp)

    def step(t, h):
        # Only the (Bb, Hp) x (Hp, 3Hp) matmul is on the serial critical path.
        gh = jnp.dot(h.astype(jnp.bfloat16), wh_ref[...],
                     preferred_element_type=jnp.float32)           # (Bb, 3Hp)
        gxt = gx_ref[t]                                            # (Bb, 3Hp)
        r = jax.nn.sigmoid(gxt[:, 0 * hp:1 * hp] + gh[:, 0 * hp:1 * hp])
        z = jax.nn.sigmoid(gxt[:, 1 * hp:2 * hp] + gh[:, 1 * hp:2 * hp])
        n = jnp.tanh(gxt[:, 2 * hp:3 * hp]
                     + r * (gh[:, 2 * hp:3 * hp] + bhn_ref[...]))
        h_new = (1.0 - z) * n + z * h                              # f32 VPU math
        if t_padded != t_valid:          # static: mask only if time was padded
            h_new = jnp.where(ci * tc + t < t_valid, h_new, h)
        return h_new

    unroll = tc if tc <= 16 else 8
    h_final = jax.lax.fori_loop(0, tc, step, h_ref[...], unroll=unroll)
    h_ref[...] = h_final

    @pl.when(ci == pl.num_programs(1) - 1)
    def _():
        out_ref[...] = (jnp.dot(h_final, fcw_ref[...],
                                preferred_element_type=jnp.float32)
                        + fcb_ref[...])


def gru_model_forward(x, params, *, max_time_chunk=32, max_batch_block=128):
    """x: (B, T, I) float32 -> (B, 1) float32 (matches GRUModel.forward)."""
    B, T, I = x.shape
    H = params["w_hh"].shape[1]
    f32 = jnp.float32

    # Alignment: hidden lane-padded to 128; input rounded to 8 only (true last dim
    # is exempt from the 128 rule, avoids 32x inflation of the x HBM stream);
    # batch rounded to a multiple of 8.
    Hp = _round_up(H, 128)
    Ik = _round_up(I, 8)
    Bb = min(_round_up(B, 8), max_batch_block)      # per-grid-step batch block
    Bp = _round_up(B, Bb)                           # padded batch
    Tc = min(max_time_chunk, T)                     # timesteps per grid step
    Tp = _round_up(T, Tc)                           # padded time (tail masked)

    # Time-major, padded input (transpose fuses with the padding copy).
    x_tm = jnp.transpose(x, (1, 0, 2)).astype(f32)                      # (T, B, I)
    x_pad = jnp.zeros((Tp, Bp, Ik), f32).at[:T, :B, :I].set(x_tm)

    w_ih = params["w_ih"].astype(f32)   # (3H, I)  rows: [r, z, n]
    w_hh = params["w_hh"].astype(f32)   # (3H, H)
    b_ih = params["b_ih"].astype(f32)
    b_hh = params["b_hh"].astype(f32)

    # x-side weights / biases (column blocks [r, z, n_x], each Hp wide, 128-aligned).
    Wx = jnp.zeros((Ik, 3 * Hp), f32)
    Wx = Wx.at[:I, 0 * Hp:0 * Hp + H].set(w_ih[0 * H:1 * H].T)
    Wx = Wx.at[:I, 1 * Hp:1 * Hp + H].set(w_ih[1 * H:2 * H].T)
    Wx = Wx.at[:I, 2 * Hp:2 * Hp + H].set(w_ih[2 * H:3 * H].T)

    bx = jnp.zeros((1, 3 * Hp), f32)
    bx = bx.at[0, 0 * Hp:0 * Hp + H].set(b_ih[0 * H:1 * H] + b_hh[0 * H:1 * H])
    bx = bx.at[0, 1 * Hp:1 * Hp + H].set(b_ih[1 * H:2 * H] + b_hh[1 * H:2 * H])
    bx = bx.at[0, 2 * Hp:2 * Hp + H].set(b_ih[2 * H:3 * H])

    # h-side weights (bf16 -> native MXU rate; f32 accumulation in-kernel).
    Wh = jnp.zeros((Hp, 3 * Hp), f32)
    Wh = Wh.at[:H, 0 * Hp:0 * Hp + H].set(w_hh[0 * H:1 * H].T)
    Wh = Wh.at[:H, 1 * Hp:1 * Hp + H].set(w_hh[1 * H:2 * H].T)
    Wh = Wh.at[:H, 2 * Hp:2 * Hp + H].set(w_hh[2 * H:3 * H].T)
    Wh = Wh.astype(jnp.bfloat16)

    bhn = jnp.zeros((1, Hp), f32).at[0, :H].set(b_hh[2 * H:3 * H])

    fcw = jnp.zeros((Hp, 128), f32).at[:H, 0].set(params["fc_w"].astype(f32)[0])
    fcb = jnp.zeros((1, 128), f32).at[0, 0].set(params["fc_b"].astype(f32)[0])

    nb, nc = Bp // Bb, Tp // Tc

    grid_spec = pltpu.PrefetchScalarGridSpec(
        num_scalar_prefetch=0,
        grid=(nb, nc),   # batch outer/parallel, time inner/sequential (required!)
        in_specs=[
            pl.BlockSpec((Tc, Bb, Ik), lambda bi, ci: (ci, bi, 0)),      # x chunk
            pl.BlockSpec((Ik, 3 * Hp), lambda bi, ci: (0, 0)),           # Wx
            pl.BlockSpec((1, 3 * Hp), lambda bi, ci: (0, 0)),            # bx
            pl.BlockSpec((Hp, 3 * Hp), lambda bi, ci: (0, 0)),           # Wh (bf16)
            pl.BlockSpec((1, Hp), lambda bi, ci: (0, 0)),                # b_hn
            pl.BlockSpec((Hp, 128), lambda bi, ci: (0, 0)),              # fc W^T
            pl.BlockSpec((1, 128), lambda bi, ci: (0, 0)),               # fc b
        ],
        out_specs=pl.BlockSpec((Bb, 128), lambda bi, ci: (bi, 0)),       # resident out
        scratch_shapes=[
            pltpu.VMEM((Tc, Bb, 3 * Hp), f32),   # precomputed x-gates for the chunk
            pltpu.VMEM((Bb, Hp), f32),           # hidden-state carry
        ],
    )

    out = pl.pallas_call(
        functools.partial(gru_fc_kernel, t_valid=T, t_padded=Tp),
        out_shape=jax.ShapeDtypeStruct((Bp, 128), f32),
        grid_spec=grid_spec,
        compiler_params=pltpu.CompilerParams(
            dimension_semantics=("parallel", "arbitrary")),
    )(x_pad, Wx, bx, Wh, bhn, fcw, fcb)

    return out[:B, :1]


def init_params(key, input_size, hidden_size):
    """Deterministic PyTorch-style init: U(-1/sqrt(H), 1/sqrt(H))."""
    k = 1.0 / jnp.sqrt(hidden_size)
    keys = jax.random.split(key, 6)
    u = lambda kk, shape: jax.random.uniform(kk, shape, jnp.float32, -k, k)
    return {
        "w_ih": u(keys[0], (3 * hidden_size, input_size)),
        "w_hh": u(keys[1], (3 * hidden_size, hidden_size)),
        "b_ih": u(keys[2], (3 * hidden_size,)),
        "b_hh": u(keys[3], (3 * hidden_size,)),
        "fc_w": u(keys[4], (1, hidden_size)),
        "fc_b": u(keys[5], (1,)),
    }


def reference_forward(x, params):
    """Pure-JAX reference of the PyTorch GRUModel forward (for verification)."""
    B, T, I = x.shape
    H = params["w_hh"].shape[1]
    wih_t, whh_t = params["w_ih"].T, params["w_hh"].T
    bih, bhh = params["b_ih"], params["b_hh"]

    def step(h, x_t):
        gi = x_t @ wih_t + bih
        gh = h @ whh_t + bhh
        i_r, i_z, i_n = gi[:, :H], gi[:, H:2 * H], gi[:, 2 * H:]
        h_r, h_z, h_n = gh[:, :H], gh[:, H:2 * H], gh[:, 2 * H:]
        r = jax.nn.sigmoid(i_r + h_r)
        z = jax.nn.sigmoid(i_z + h_z)
        n = jnp.tanh(i_n + r * h_n)
        h_new = (1.0 - z) * n + z * h
        return h_new, None

    h0 = jnp.zeros((B, H), jnp.float32)
    h_last, _ = jax.lax.scan(step, h0, jnp.transpose(x, (1, 0, 2)))
    return h_last @ params["fc_w"].T + params["fc_b"]


if __name__ == "__main__":
    B, T, I, H = 2, 8, 4, 32
    key = jax.random.PRNGKey(0)
    kx, kp = jax.random.split(key)
    x = jax.random.normal(kx, (B, T, I), dtype=jnp.float32)
    params = init_params(kp, I, H)

    forward = jax.jit(gru_model_forward)
    out = forward(x, params)
    out = jax.block_until_ready(out)
    assert out.shape == (B, 1), out.shape

    ref = reference_forward(x, params)
    # bf16 W_h / default-precision matmuls -> slightly looser tolerance vs f32 ref.
    assert jnp.allclose(out, ref, atol=2e-2, rtol=2e-2), (out, ref)

    print("KERNEL_OK")
</pallas_src>

<mosaic_0001>
module attributes {stable_mosaic.version = 11 : i64} {
  func.func @gru_fc_kernel(%arg0: i32, %arg1: i32, %arg2: memref<8x8x8xf32, #tpu.memory_space<vmem>>, %arg3: memref<8x384xf32, #tpu.memory_space<vmem>>, %arg4: memref<1x384xf32, #tpu.memory_space<vmem>>, %arg5: memref<128x384xbf16, #tpu.memory_space<vmem>>, %arg6: memref<1x128xf32, #tpu.memory_space<vmem>>, %arg7: memref<128x128xf32, #tpu.memory_space<vmem>>, %arg8: memref<1x128xf32, #tpu.memory_space<vmem>>, %arg9: memref<8x128xf32, #tpu.memory_space<vmem>>, %arg10: memref<8x8x384xf32, #tpu.memory_space<vmem>>, %arg11: memref<8x128xf32, #tpu.memory_space<vmem>>) attributes {dimension_semantics = [#tpu.dimension_semantics<parallel>, #tpu.dimension_semantics<arbitrary>], iteration_bounds = array<i64: 1, 1>, scalar_prefetch = 0 : i64, scratch_operands = 2 : i64, tpu.core_type = #tpu.core_type<tc>, window_params = [{transform_indices = @transform_0, window_bounds = array<i64: 8, 8, 8>}, {pipeline_mode = #tpu.pipeline_mode<synchronous>, transform_indices = @transform_1, window_bounds = array<i64: 8, 384>}, {pipeline_mode = #tpu.pipeline_mode<synchronous>, transform_indices = @transform_2, window_bounds = array<i64: 1, 384>}, {pipeline_mode = #tpu.pipeline_mode<synchronous>, transform_indices = @transform_3, window_bounds = array<i64: 128, 384>}, {pipeline_mode = #tpu.pipeline_mode<synchronous>, transform_indices = @transform_4, window_bounds = array<i64: 1, 128>}, {pipeline_mode = #tpu.pipeline_mode<synchronous>, transform_indices = @transform_5, window_bounds = array<i64: 128, 128>}, {pipeline_mode = #tpu.pipeline_mode<synchronous>, transform_indices = @transform_6, window_bounds = array<i64: 1, 128>}, {transform_indices = @transform_7, window_bounds = array<i64: 8, 128>}]} {
    %c0_i32 = arith.constant 0 : i32
    %0 = arith.cmpi eq, %arg1, %c0_i32 : i32
    %1 = arith.extui %0 : i1 to i32
    %c0_i32_0 = arith.constant 0 : i32
    %2 = arith.cmpi ne, %1, %c0_i32_0 : i32
    scf.if %2 {
      %cst_97 = arith.constant 0.000000e+00 : f32
      %297 = vector.broadcast %cst_97 : f32 to vector<8x128xf32>
      %c0_98 = arith.constant 0 : index
      %c0_99 = arith.constant 0 : index
      %298 = vector.load %arg11[%c0_98, %c0_99] : memref<8x128xf32, #tpu.memory_space<vmem>>, vector<8x128xf32>
      tpu.vector_store %arg11[%c0_98, %c0_99], %297 {strides = array<i32>} : memref<8x128xf32, #tpu.memory_space<vmem>>, vector<8x128xf32>,
    } else {
    }
    %c0 = arith.constant 0 : index
    %c0_1 = arith.constant 0 : index
    %c0_2 = arith.constant 0 : index
    %3 = vector.load %arg2[%c0, %c0_1, %c0_2] : memref<8x8x8xf32, #tpu.memory_space<vmem>>, vector<8x8x8xf32>
    %4 = vector.shape_cast %3 : vector<8x8x8xf32> to vector<64x8xf32>
    %c0_3 = arith.constant 0 : index
    %c0_4 = arith.constant 0 : index
    %5 = vector.load %arg3[%c0_3, %c0_4] : memref<8x384xf32, #tpu.memory_space<vmem>>, vector<8x384xf32>
    %cst = arith.constant dense<0.000000e+00> : vector<64x384xf32>
    %6 = tpu.matmul %4, %5, %cst {dimension_numbers = #tpu.dot_dimension_numbers<[1], [0], [0], [1], [0, 0, 1, 1], [], []>} : vector<64x8xf32>, vector<8x384xf32>, vector<64x384xf32> -> vector<64x384xf32>
    %c0_5 = arith.constant 0 : index
    %c0_6 = arith.constant 0 : index
    %7 = vector.load %arg4[%c0_5, %c0_6] : memref<1x384xf32, #tpu.memory_space<vmem>>, vector<1x384xf32>
    %8 = vector.broadcast %7 : vector<1x384xf32> to vector<64x384xf32>
    %9 = arith.addf %6, %8 : vector<64x384xf32>
    %10 = vector.shape_cast %9 : vector<64x384xf32> to vector<8x8x384xf32>
    %c0_7 = arith.constant 0 : index
    %c0_8 = arith.constant 0 : index
    %c0_9 = arith.constant 0 : index
    %11 = vector.load %arg10[%c0_7, %c0_8, %c0_9] : memref<8x8x384xf32, #tpu.memory_space<vmem>>, vector<8x8x384xf32>
    tpu.vector_store %arg10[%c0_7, %c0_8, %c0_9], %10 {strides = array<i32>} : memref<8x8x384xf32, #tpu.memory_space<vmem>>, vector<8x8x384xf32>,
    %c0_10 = arith.constant 0 : index
    %c0_11 = arith.constant 0 : index
    %12 = vector.load %arg11[%c0_10, %c0_11] : memref<8x128xf32, #tpu.memory_space<vmem>>, vector<8x128xf32>
    %c0_i32_12 = arith.constant 0 : i32
    %13 = arith.truncf %12 : vector<8x128xf32> to vector<8x128xbf16>
    %c0_13 = arith.constant 0 : index
    %c0_14 = arith.constant 0 : index
    %14 = vector.load %arg5[%c0_13, %c0_14] : memref<128x384xbf16, #tpu.memory_space<vmem>>, vector<128x384xbf16>
    %cst_15 = arith.constant dense<0.000000e+00> : vector<8x384xf32>
    %15 = tpu.matmul %13, %14, %cst_15 {dimension_numbers = #tpu.dot_dimension_numbers<[1], [0], [0], [1], [0, 0, 1, 1], [], []>} : vector<8x128xbf16>, vector<128x384xbf16>, vector<8x384xf32> -> vector<8x384xf32>
    %16 = arith.index_cast %c0_i32_12 : i32 to index
    %c0_16 = arith.constant 0 : index
    %c0_17 = arith.constant 0 : index
    %17 = vector.load %arg10[%16, %c0_16, %c0_17] : memref<8x8x384xf32, #tpu.memory_space<vmem>>, vector<1x8x384xf32>
    %18 = vector.shape_cast %17 : vector<1x8x384xf32> to vector<8x384xf32>
    %19 = vector.extract_strided_slice %18 {offsets = [0, 0], sizes = [8, 128], strides = [1, 1]} : vector<8x384xf32> to vector<8x128xf32>
    %20 = vector.extract_strided_slice %15 {offsets = [0, 0], sizes = [8, 128], strides = [1, 1]} : vector<8x384xf32> to vector<8x128xf32>
    %21 = arith.addf %19, %20 : vector<8x128xf32>
    %22 = arith.negf %21 : vector<8x128xf32>
    %23 = math.exp %22 : vector<8x128xf32>
    %cst_18 = arith.constant 1.000000e+00 : f32
    %24 = vector.broadcast %cst_18 : f32 to vector<8x128xf32>
    %25 = arith.addf %24, %23 : vector<8x128xf32>
    %26 = arith.divf %24, %25 : vector<8x128xf32>
    %27 = vector.extract_strided_slice %18 {offsets = [0, 128], sizes = [8, 128], strides = [1, 1]} : vector<8x384xf32> to vector<8x128xf32>
    %28 = vector.extract_strided_slice %15 {offsets = [0, 128], sizes = [8, 128], strides = [1, 1]} : vector<8x384xf32> to vector<8x128xf32>
    %29 = arith.addf %27, %28 : vector<8x128xf32>
    %30 = arith.negf %29 : vector<8x128xf32>
    %31 = math.exp %30 : vector<8x128xf32>
    %cst_19 = arith.constant 1.000000e+00 : f32
    %32 = vector.broadcast %cst_19 : f32 to vector<8x128xf32>
    %33 = arith.addf %32, %31 : vector<8x128xf32>
    %34 = arith.divf %32, %33 : vector<8x128xf32>
    %35 = vector.extract_strided_slice %18 {offsets = [0, 256], sizes = [8, 128], strides = [1, 1]} : vector<8x384xf32> to vector<8x128xf32>
    %36 = vector.extract_strided_slice %15 {offsets = [0, 256], sizes = [8, 128], strides = [1, 1]} : vector<8x384xf32> to vector<8x128xf32>
    %c0_20 = arith.constant 0 : index
    %c0_21 = arith.constant 0 : index
    %37 = vector.load %arg6[%c0_20, %c0_21] : memref<1x128xf32, #tpu.memory_space<vmem>>, vector<1x128xf32>
    %38 = vector.broadcast %37 : vector<1x128xf32> to vector<8x128xf32>
    %39 = arith.addf %36, %38 : vector<8x128xf32>
    %40 = arith.mulf %26, %39 : vector<8x128xf32>
    %41 = arith.addf %35, %40 : vector<8x128xf32>
    %42 = math.tanh %41 : vector<8x128xf32>
    %cst_22 = arith.constant 1.000000e+00 : f32
    %43 = vector.broadcast %cst_22 : f32 to vector<8x128xf32>
    %44 = arith.subf %43, %34 : vector<8x128xf32>
    %45 = arith.mulf %44, %42 : vector<8x128xf32>
    %46 = arith.mulf %34, %12 : vector<8x128xf32>
    %47 = arith.addf %45, %46 : vector<8x128xf32>
    %c1_i32 = arith.constant 1 : i32
    %48 = arith.truncf %47 : vector<8x128xf32> to vector<8x128xbf16>
    %c0_23 = arith.constant 0 : index
    %c0_24 = arith.constant 0 : index
    %49 = vector.load %arg5[%c0_23, %c0_24] : memref<128x384xbf16, #tpu.memory_space<vmem>>, vector<128x384xbf16>
    %cst_25 = arith.constant dense<0.000000e+00> : vector<8x384xf32>
    %50 = tpu.matmul %48, %49, %cst_25 {dimension_numbers = #tpu.dot_dimension_numbers<[1], [0], [0], [1], [0, 0, 1, 1], [], []>} : vector<8x128xbf16>, vector<128x384xbf16>, vector<8x384xf32> -> vector<8x384xf32>
    %51 = arith.index_cast %c1_i32 : i32 to index
    %c0_26 = arith.constant 0 : index
    %c0_27 = arith.constant 0 : index
    %52 = vector.load %arg10[%51, %c0_26, %c0_27] : memref<8x8x384xf32, #tpu.memory_space<vmem>>, vector<1x8x384xf32>
    %53 = vector.shape_cast %52 : vector<1x8x384xf32> to vector<8x384xf32>
    %54 = vector.extract_strided_slice %53 {offsets = [0, 0], sizes = [8, 128], strides = [1, 1]} : vector<8x384xf32> to vector<8x128xf32>
    %55 = vector.extract_strided_slice %50 {offsets = [0, 0], sizes = [8, 128], strides = [1, 1]} : vector<8x384xf32> to vector<8x128xf32>
    %56 = arith.addf %54, %55 : vector<8x128xf32>
    %57 = arith.negf %56 : vector<8x128xf32>
    %58 = math.exp %57 : vector<8x128xf32>
    %cst_28 = arith.constant 1.000000e+00 : f32
    %59 = vector.broadcast %cst_28 : f32 to vector<8x128xf32>
    %60 = arith.addf %59, %58 : vector<8x128xf32>
    %61 = arith.divf %59, %60 : vector<8x128xf32>
    %62 = vector.extract_strided_slice %53 {offsets = [0, 128], sizes = [8, 128], strides = [1, 1]} : vector<8x384xf32> to vector<8x128xf32>
    %63 = vector.extract_strided_slice %50 {offsets = [0, 128], sizes = [8, 128], strides = [1, 1]} : vector<8x384xf32> to vector<8x128xf32>
    %64 = arith.addf %62, %63 : vector<8x128xf32>
    %65 = arith.negf %64 : vector<8x128xf32>
    %66 = math.exp %65 : vector<8x128xf32>
    %cst_29 = arith.constant 1.000000e+00 : f32
    %67 = vector.broadcast %cst_29 : f32 to vector<8x128xf32>
    %68 = arith.addf %67, %66 : vector<8x128xf32>
    %69 = arith.divf %67, %68 : vector<8x128xf32>
    %70 = vector.extract_strided_slice %53 {offsets = [0, 256], sizes = [8, 128], strides = [1, 1]} : vector<8x384xf32> to vector<8x128xf32>
    %71 = vector.extract_strided_slice %50 {offsets = [0, 256], sizes = [8, 128], strides = [1, 1]} : vector<8x384xf32> to vector<8x128xf32>
    %c0_30 = arith.constant 0 : index
    %c0_31 = arith.constant 0 : index
    %72 = vector.load %arg6[%c0_30, %c0_31] : memref<1x128xf32, #tpu.memory_space<vmem>>, vector<1x128xf32>
    %73 = vector.broadcast %72 : vector<1x128xf32> to vector<8x128xf32>
    %74 = arith.addf %71, %73 : vector<8x128xf32>
    %75 = arith.mulf %61, %74 : vector<8x128xf32>
    %76 = arith.addf %70, %75 : vector<8x128xf32>
    %77 = math.tanh %76 : vector<8x128xf32>
    %cst_32 = arith.constant 1.000000e+00 : f32
    %78 = vector.broadcast %cst_32 : f32 to vector<8x128xf32>
    %79 = arith.subf %78, %69 : vector<8x128xf32>
    %80 = arith.mulf %79, %77 : vector<8x128xf32>
    %81 = arith.mulf %69, %47 : vector<8x128xf32>
    %82 = arith.addf %80, %81 : vector<8x128xf32>
    %c2_i32 = arith.constant 2 : i32
    %83 = arith.truncf %82 : vector<8x128xf32> to vector<8x128xbf16>
    %c0_33 = arith.constant 0 : index
    %c0_34 = arith.constant 0 : index
    %84 = vector.load %arg5[%c0_33, %c0_34] : memref<128x384xbf16, #tpu.memory_space<vmem>>, vector<128x384xbf16>
    %cst_35 = arith.constant dense<0.000000e+00> : vector<8x384xf32>
    %85 = tpu.matmul %83, %84, %cst_35 {dimension_numbers = #tpu.dot_dimension_numbers<[1], [0], [0], [1], [0, 0, 1, 1], [], []>} : vector<8x128xbf16>, vector<128x384xbf16>, vector<8x384xf32> -> vector<8x384xf32>
    %86 = arith.index_cast %c2_i32 : i32 to index
    %c0_36 = arith.constant 0 : index
    %c0_37 = arith.constant 0 : index
    %87 = vector.load %arg10[%86, %c0_36, %c0_37] : memref<8x8x384xf32, #tpu.memory_space<vmem>>, vector<1x8x384xf32>
    %88 = vector.shape_cast %87 : vector<1x8x384xf32> to vector<8x384xf32>
    %89 = vector.extract_strided_slice %88 {offsets = [0, 0], sizes = [8, 128], strides = [1, 1]} : vector<8x384xf32> to vector<8x128xf32>
    %90 = vector.extract_strided_slice %85 {offsets = [0, 0], sizes = [8, 128], strides = [1, 1]} : vector<8x384xf32> to vector<8x128xf32>
    %91 = arith.addf %89, %90 : vector<8x128xf32>
    %92 = arith.negf %91 : vector<8x128xf32>
    %93 = math.exp %92 : vector<8x128xf32>
    %cst_38 = arith.constant 1.000000e+00 : f32
    %94 = vector.broadcast %cst_38 : f32 to vector<8x128xf32>
    %95 = arith.addf %94, %93 : vector<8x128xf32>
    %96 = arith.divf %94, %95 : vector<8x128xf32>
    %97 = vector.extract_strided_slice %88 {offsets = [0, 128], sizes = [8, 128], strides = [1, 1]} : vector<8x384xf32> to vector<8x128xf32>
    %98 = vector.extract_strided_slice %85 {offsets = [0, 128], sizes = [8, 128], strides = [1, 1]} : vector<8x384xf32> to vector<8x128xf32>
    %99 = arith.addf %97, %98 : vector<8x128xf32>
    %100 = arith.negf %99 : vector<8x128xf32>
    %101 = math.exp %100 : vector<8x128xf32>
    %cst_39 = arith.constant 1.000000e+00 : f32
    %102 = vector.broadcast %cst_39 : f32 to vector<8x128xf32>
    %103 = arith.addf %102, %101 : vector<8x128xf32>
    %104 = arith.divf %102, %103 : vector<8x128xf32>
    %105 = vector.extract_strided_slice %88 {offsets = [0, 256], sizes = [8, 128], strides = [1, 1]} : vector<8x384xf32> to vector<8x128xf32>
    %106 = vector.extract_strided_slice %85 {offsets = [0, 256], sizes = [8, 128], strides = [1, 1]} : vector<8x384xf32> to vector<8x128xf32>
    %c0_40 = arith.constant 0 : index
    %c0_41 = arith.constant 0 : index
    %107 = vector.load %arg6[%c0_40, %c0_41] : memref<1x128xf32, #tpu.memory_space<vmem>>, vector<1x128xf32>
    %108 = vector.broadcast %107 : vector<1x128xf32> to vector<8x128xf32>
    %109 = arith.addf %106, %108 : vector<8x128xf32>
    %110 = arith.mulf %96, %109 : vector<8x128xf32>
    %111 = arith.addf %105, %110 : vector<8x128xf32>
    %112 = math.tanh %111 : vector<8x128xf32>
    %cst_42 = arith.constant 1.000000e+00 : f32
    %113 = vector.broadcast %cst_42 : f32 to vector<8x128xf32>
    %114 = arith.subf %113, %104 : vector<8x128xf32>
    %115 = arith.mulf %114, %112 : vector<8x128xf32>
    %116 = arith.mulf %104, %82 : vector<8x128xf32>
    %117 = arith.addf %115, %116 : vector<8x128xf32>
    %c3_i32 = arith.constant 3 : i32
    %118 = arith.truncf %117 : vector<8x128xf32> to vector<8x128xbf16>
    %c0_43 = arith.constant 0 : index
    %c0_44 = arith.constant 0 : index
    %119 = vector.load %arg5[%c0_43, %c0_44] : memref<128x384xbf16, #tpu.memory_space<vmem>>, vector<128x384xbf16>
    %cst_45 = arith.constant dense<0.000000e+00> : vector<8x384xf32>
    %120 = tpu.matmul %118, %119, %cst_45 {dimension_numbers = #tpu.dot_dimension_numbers<[1], [0], [0], [1], [0, 0, 1, 1], [], []>} : vector<8x128xbf16>, vector<128x384xbf16>, vector<8x384xf32> -> vector<8x384xf32>
    %121 = arith.index_cast %c3_i32 : i32 to index
    %c0_46 = arith.constant 0 : index
    %c0_47 = arith.constant 0 : index
    %122 = vector.load %arg10[%121, %c0_46, %c0_47] : memref<8x8x384xf32, #tpu.memory_space<vmem>>, vector<1x8x384xf32>
    %123 = vector.shape_cast %122 : vector<1x8x384xf32> to vector<8x384xf32>
    %124 = vector.extract_strided_slice %123 {offsets = [0, 0], sizes = [8, 128], strides = [1, 1]} : vector<8x384xf32> to vector<8x128xf32>
    %125 = vector.extract_strided_slice %120 {offsets = [0, 0], sizes = [8, 128], strides = [1, 1]} : vector<8x384xf32> to vector<8x128xf32>
    %126 = arith.addf %124, %125 : vector<8x128xf32>
    %127 = arith.negf %126 : vector<8x128xf32>
    %128 = math.exp %127 : vector<8x128xf32>
    %cst_48 = arith.constant 1.000000e+00 : f32
    %129 = vector.broadcast %cst_48 : f32 to vector<8x128xf32>
    %130 = arith.addf %129, %128 : vector<8x128xf32>
    %131 = arith.divf %129, %130 : vector<8x128xf32>
    %132 = vector.extract_strided_slice %123 {offsets = [0, 128], sizes = [8, 128], strides = [1, 1]} : vector<8x384xf32> to vector<8x128xf32>
    %133 = vector.extract_strided_slice %120 {offsets = [0, 128], sizes = [8, 128], strides = [1, 1]} : vector<8x384xf32> to vector<8x128xf32>
    %134 = arith.addf %132, %133 : vector<8x128xf32>
    %135 = arith.negf %134 : vector<8x128xf32>
    %136 = math.exp %135 : vector<8x128xf32>
    %cst_49 = arith.constant 1.000000e+00 : f32
    %137 = vector.broadcast %cst_49 : f32 to vector<8x128xf32>
    %138 = arith.addf %137, %136 : vector<8x128xf32>
    %139 = arith.divf %137, %138 : vector<8x128xf32>
    %140 = vector.extract_strided_slice %123 {offsets = [0, 256], sizes = [8, 128], strides = [1, 1]} : vector<8x384xf32> to vector<8x128xf32>
    %141 = vector.extract_strided_slice %120 {offsets = [0, 256], sizes = [8, 128], strides = [1, 1]} : vector<8x384xf32> to vector<8x128xf32>
    %c0_50 = arith.constant 0 : index
    %c0_51 = arith.constant 0 : index
    %142 = vector.load %arg6[%c0_50, %c0_51] : memref<1x128xf32, #tpu.memory_space<vmem>>, vector<1x128xf32>
    %143 = vector.broadcast %142 : vector<1x128xf32> to vector<8x128xf32>
    %144 = arith.addf %141, %143 : vector<8x128xf32>
    %145 = arith.mulf %131, %144 : vector<8x128xf32>
    %146 = arith.addf %140, %145 : vector<8x128xf32>
    %147 = math.tanh %146 : vector<8x128xf32>
    %cst_52 = arith.constant 1.000000e+00 : f32
    %148 = vector.broadcast %cst_52 : f32 to vector<8x128xf32>
    %149 = arith.subf %148, %139 : vector<8x128xf32>
    %150 = arith.mulf %149, %147 : vector<8x128xf32>
    %151 = arith.mulf %139, %117 : vector<8x128xf32>
    %152 = arith.addf %150, %151 : vector<8x128xf32>
    %c4_i32 = arith.constant 4 : i32
    %153 = arith.truncf %152 : vector<8x128xf32> to vector<8x128xbf16>
    %c0_53 = arith.constant 0 : index
    %c0_54 = arith.constant 0 : index
    %154 = vector.load %arg5[%c0_53, %c0_54] : memref<128x384xbf16, #tpu.memory_space<vmem>>, vector<128x384xbf16>
    %cst_55 = arith.constant dense<0.000000e+00> : vector<8x384xf32>
    %155 = tpu.matmul %153, %154, %cst_55 {dimension_numbers = #tpu.dot_dimension_numbers<[1], [0], [0], [1], [0, 0, 1, 1], [], []>} : vector<8x128xbf16>, vector<128x384xbf16>, vector<8x384xf32> -> vector<8x384xf32>
    %156 = arith.index_cast %c4_i32 : i32 to index
    %c0_56 = arith.constant 0 : index
    %c0_57 = arith.constant 0 : index
    %157 = vector.load %arg10[%156, %c0_56, %c0_57] : memref<8x8x384xf32, #tpu.memory_space<vmem>>, vector<1x8x384xf32>
    %158 = vector.shape_cast %157 : vector<1x8x384xf32> to vector<8x384xf32>
    %159 = vector.extract_strided_slice %158 {offsets = [0, 0], sizes = [8, 128], strides = [1, 1]} : vector<8x384xf32> to vector<8x128xf32>
    %160 = vector.extract_strided_slice %155 {offsets = [0, 0], sizes = [8, 128], strides = [1, 1]} : vector<8x384xf32> to vector<8x128xf32>
    %161 = arith.addf %159, %160 : vector<8x128xf32>
    %162 = arith.negf %161 : vector<8x128xf32>
    %163 = math.exp %162 : vector<8x128xf32>
    %cst_58 = arith.constant 1.000000e+00 : f32
    %164 = vector.broadcast %cst_58 : f32 to vector<8x128xf32>
    %165 = arith.addf %164, %163 : vector<8x128xf32>
    %166 = arith.divf %164, %165 : vector<8x128xf32>
    %167 = vector.extract_strided_slice %158 {offsets = [0, 128], sizes = [8, 128], strides = [1, 1]} : vector<8x384xf32> to vector<8x128xf32>
    %168 = vector.extract_strided_slice %155 {offsets = [0, 128], sizes = [8, 128], strides = [1, 1]} : vector<8x384xf32> to vector<8x128xf32>
    %169 = arith.addf %167, %168 : vector<8x128xf32>
    %170 = arith.negf %169 : vector<8x128xf32>
    %171 = math.exp %170 : vector<8x128xf32>
    %cst_59 = arith.constant 1.000000e+00 : f32
    %172 = vector.broadcast %cst_59 : f32 to vector<8x128xf32>
    %173 = arith.addf %172, %171 : vector<8x128xf32>
    %174 = arith.divf %172, %173 : vector<8x128xf32>
    %175 = vector.extract_strided_slice %158 {offsets = [0, 256], sizes = [8, 128], strides = [1, 1]} : vector<8x384xf32> to vector<8x128xf32>
    %176 = vector.extract_strided_slice %155 {offsets = [0, 256], sizes = [8, 128], strides = [1, 1]} : vector<8x384xf32> to vector<8x128xf32>
    %c0_60 = arith.constant 0 : index
    %c0_61 = arith.constant 0 : index
    %177 = vector.load %arg6[%c0_60, %c0_61] : memref<1x128xf32, #tpu.memory_space<vmem>>, vector<1x128xf32>
    %178 = vector.broadcast %177 : vector<1x128xf32> to vector<8x128xf32>
    %179 = arith.addf %176, %178 : vector<8x128xf32>
    %180 = arith.mulf %166, %179 : vector<8x128xf32>
    %181 = arith.addf %175, %180 : vector<8x128xf32>
    %182 = math.tanh %181 : vector<8x128xf32>
    %cst_62 = arith.constant 1.000000e+00 : f32
    %183 = vector.broadcast %cst_62 : f32 to vector<8x128xf32>
    %184 = arith.subf %183, %174 : vector<8x128xf32>
    %185 = arith.mulf %184, %182 : vector<8x128xf32>
    %186 = arith.mulf %174, %152 : vector<8x128xf32>
    %187 = arith.addf %185, %186 : vector<8x128xf32>
    %c5_i32 = arith.constant 5 : i32
    %188 = arith.truncf %187 : vector<8x128xf32> to vector<8x128xbf16>
    %c0_63 = arith.constant 0 : index
    %c0_64 = arith.constant 0 : index
    %189 = vector.load %arg5[%c0_63, %c0_64] : memref<128x384xbf16, #tpu.memory_space<vmem>>, vector<128x384xbf16>
    %cst_65 = arith.constant dense<0.000000e+00> : vector<8x384xf32>
    %190 = tpu.matmul %188, %189, %cst_65 {dimension_numbers = #tpu.dot_dimension_numbers<[1], [0], [0], [1], [0, 0, 1, 1], [], []>} : vector<8x128xbf16>, vector<128x384xbf16>, vector<8x384xf32> -> vector<8x384xf32>
    %191 = arith.index_cast %c5_i32 : i32 to index
    %c0_66 = arith.constant 0 : index
    %c0_67 = arith.constant 0 : index
    %192 = vector.load %arg10[%191, %c0_66, %c0_67] : memref<8x8x384xf32, #tpu.memory_space<vmem>>, vector<1x8x384xf32>
    %193 = vector.shape_cast %192 : vector<1x8x384xf32> to vector<8x384xf32>
    %194 = vector.extract_strided_slice %193 {offsets = [0, 0], sizes = [8, 128], strides = [1, 1]} : vector<8x384xf32> to vector<8x128xf32>
    %195 = vector.extract_strided_slice %190 {offsets = [0, 0], sizes = [8, 128], strides = [1, 1]} : vector<8x384xf32> to vector<8x128xf32>
    %196 = arith.addf %194, %195 : vector<8x128xf32>
    %197 = arith.negf %196 : vector<8x128xf32>
    %198 = math.exp %197 : vector<8x128xf32>
    %cst_68 = arith.constant 1.000000e+00 : f32
    %199 = vector.broadcast %cst_68 : f32 to vector<8x128xf32>
    %200 = arith.addf %199, %198 : vector<8x128xf32>
    %201 = arith.divf %199, %200 : vector<8x128xf32>
    %202 = vector.extract_strided_slice %193 {offsets = [0, 128], sizes = [8, 128], strides = [1, 1]} : vector<8x384xf32> to vector<8x128xf32>
    %203 = vector.extract_strided_slice %190 {offsets = [0, 128], sizes = [8, 128], strides = [1, 1]} : vector<8x384xf32> to vector<8x128xf32>
    %204 = arith.addf %202, %203 : vector<8x128xf32>
    %205 = arith.negf %204 : vector<8x128xf32>
    %206 = math.exp %205 : vector<8x128xf32>
    %cst_69 = arith.constant 1.000000e+00 : f32
    %207 = vector.broadcast %cst_69 : f32 to vector<8x128xf32>
    %208 = arith.addf %207, %206 : vector<8x128xf32>
    %209 = arith.divf %207, %208 : vector<8x128xf32>
    %210 = vector.extract_strided_slice %193 {offsets = [0, 256], sizes = [8, 128], strides = [1, 1]} : vector<8x384xf32> to vector<8x128xf32>
    %211 = vector.extract_strided_slice %190 {offsets = [0, 256], sizes = [8, 128], strides = [1, 1]} : vector<8x384xf32> to vector<8x128xf32>
    %c0_70 = arith.constant 0 : index
    %c0_71 = arith.constant 0 : index
    %212 = vector.load %arg6[%c0_70, %c0_71] : memref<1x128xf32, #tpu.memory_space<vmem>>, vector<1x128xf32>
    %213 = vector.broadcast %212 : vector<1x128xf32> to vector<8x128xf32>
    %214 = arith.addf %211, %213 : vector<8x128xf32>
    %215 = arith.mulf %201, %214 : vector<8x128xf32>
    %216 = arith.addf %210, %215 : vector<8x128xf32>
    %217 = math.tanh %216 : vector<8x128xf32>
    %cst_72 = arith.constant 1.000000e+00 : f32
    %218 = vector.broadcast %cst_72 : f32 to vector<8x128xf32>
    %219 = arith.subf %218, %209 : vector<8x128xf32>
    %220 = arith.mulf %219, %217 : vector<8x128xf32>
    %221 = arith.mulf %209, %187 : vector<8x128xf32>
    %222 = arith.addf %220, %221 : vector<8x128xf32>
    %c6_i32 = arith.constant 6 : i32
    %223 = arith.truncf %222 : vector<8x128xf32> to vector<8x128xbf16>
    %c0_73 = arith.constant 0 : index
    %c0_74 = arith.constant 0 : index
    %224 = vector.load %arg5[%c0_73, %c0_74] : memref<128x384xbf16, #tpu.memory_space<vmem>>, vector<128x384xbf16>
    %cst_75 = arith.constant dense<0.000000e+00> : vector<8x384xf32>
    %225 = tpu.matmul %223, %224, %cst_75 {dimension_numbers = #tpu.dot_dimension_numbers<[1], [0], [0], [1], [0, 0, 1, 1], [], []>} : vector<8x128xbf16>, vector<128x384xbf16>, vector<8x384xf32> -> vector<8x384xf32>
    %226 = arith.index_cast %c6_i32 : i32 to index
    %c0_76 = arith.constant 0 : index
    %c0_77 = arith.constant 0 : index
    %227 = vector.load %arg10[%226, %c0_76, %c0_77] : memref<8x8x384xf32, #tpu.memory_space<vmem>>, vector<1x8x384xf32>
    %228 = vector.shape_cast %227 : vector<1x8x384xf32> to vector<8x384xf32>
    %229 = vector.extract_strided_slice %228 {offsets = [0, 0], sizes = [8, 128], strides = [1, 1]} : vector<8x384xf32> to vector<8x128xf32>
    %230 = vector.extract_strided_slice %225 {offsets = [0, 0], sizes = [8, 128], strides = [1, 1]} : vector<8x384xf32> to vector<8x128xf32>
    %231 = arith.addf %229, %230 : vector<8x128xf32>
    %232 = arith.negf %231 : vector<8x128xf32>
    %233 = math.exp %232 : vector<8x128xf32>
    %cst_78 = arith.constant 1.000000e+00 : f32
    %234 = vector.broadcast %cst_78 : f32 to vector<8x128xf32>
    %235 = arith.addf %234, %233 : vector<8x128xf32>
    %236 = arith.divf %234, %235 : vector<8x128xf32>
    %237 = vector.extract_strided_slice %228 {offsets = [0, 128], sizes = [8, 128], strides = [1, 1]} : vector<8x384xf32> to vector<8x128xf32>
    %238 = vector.extract_strided_slice %225 {offsets = [0, 128], sizes = [8, 128], strides = [1, 1]} : vector<8x384xf32> to vector<8x128xf32>
    %239 = arith.addf %237, %238 : vector<8x128xf32>
    %240 = arith.negf %239 : vector<8x128xf32>
    %241 = math.exp %240 : vector<8x128xf32>
    %cst_79 = arith.constant 1.000000e+00 : f32
    %242 = vector.broadcast %cst_79 : f32 to vector<8x128xf32>
    %243 = arith.addf %242, %241 : vector<8x128xf32>
    %244 = arith.divf %242, %243 : vector<8x128xf32>
    %245 = vector.extract_strided_slice %228 {offsets = [0, 256], sizes = [8, 128], strides = [1, 1]} : vector<8x384xf32> to vector<8x128xf32>
    %246 = vector.extract_strided_slice %225 {offsets = [0, 256], sizes = [8, 128], strides = [1, 1]} : vector<8x384xf32> to vector<8x128xf32>
    %c0_80 = arith.constant 0 : index
    %c0_81 = arith.constant 0 : index
    %247 = vector.load %arg6[%c0_80, %c0_81] : memref<1x128xf32, #tpu.memory_space<vmem>>, vector<1x128xf32>
    %248 = vector.broadcast %247 : vector<1x128xf32> to vector<8x128xf32>
    %249 = arith.addf %246, %248 : vector<8x128xf32>
    %250 = arith.mulf %236, %249 : vector<8x128xf32>
    %251 = arith.addf %245, %250 : vector<8x128xf32>
    %252 = math.tanh %251 : vector<8x128xf32>
    %cst_82 = arith.constant 1.000000e+00 : f32
    %253 = vector.broadcast %cst_82 : f32 to vector<8x128xf32>
    %254 = arith.subf %253, %244 : vector<8x128xf32>
    %255 = arith.mulf %254, %252 : vector<8x128xf32>
    %256 = arith.mulf %244, %222 : vector<8x128xf32>
    %257 = arith.addf %255, %256 : vector<8x128xf32>
    %c7_i32 = arith.constant 7 : i32
    %258 = arith.truncf %257 : vector<8x128xf32> to vector<8x128xbf16>
    %c0_83 = arith.constant 0 : index
    %c0_84 = arith.constant 0 : index
    %259 = vector.load %arg5[%c0_83, %c0_84] : memref<128x384xbf16, #tpu.memory_space<vmem>>, vector<128x384xbf16>
    %cst_85 = arith.constant dense<0.000000e+00> : vector<8x384xf32>
    %260 = tpu.matmul %258, %259, %cst_85 {dimension_numbers = #tpu.dot_dimension_numbers<[1], [0], [0], [1], [0, 0, 1, 1], [], []>} : vector<8x128xbf16>, vector<128x384xbf16>, vector<8x384xf32> -> vector<8x384xf32>
    %261 = arith.index_cast %c7_i32 : i32 to index
    %c0_86 = arith.constant 0 : index
    %c0_87 = arith.constant 0 : index
    %262 = vector.load %arg10[%261, %c0_86, %c0_87] : memref<8x8x384xf32, #tpu.memory_space<vmem>>, vector<1x8x384xf32>
    %263 = vector.shape_cast %262 : vector<1x8x384xf32> to vector<8x384xf32>
    %264 = vector.extract_strided_slice %263 {offsets = [0, 0], sizes = [8, 128], strides = [1, 1]} : vector<8x384xf32> to vector<8x128xf32>
    %265 = vector.extract_strided_slice %260 {offsets = [0, 0], sizes = [8, 128], strides = [1, 1]} : vector<8x384xf32> to vector<8x128xf32>
    %266 = arith.addf %264, %265 : vector<8x128xf32>
    %267 = arith.negf %266 : vector<8x128xf32>
    %268 = math.exp %267 : vector<8x128xf32>
    %cst_88 = arith.constant 1.000000e+00 : f32
    %269 = vector.broadcast %cst_88 : f32 to vector<8x128xf32>
    %270 = arith.addf %269, %268 : vector<8x128xf32>
    %271 = arith.divf %269, %270 : vector<8x128xf32>
    %272 = vector.extract_strided_slice %263 {offsets = [0, 128], sizes = [8, 128], strides = [1, 1]} : vector<8x384xf32> to vector<8x128xf32>
    %273 = vector.extract_strided_slice %260 {offsets = [0, 128], sizes = [8, 128], strides = [1, 1]} : vector<8x384xf32> to vector<8x128xf32>
    %274 = arith.addf %272, %273 : vector<8x128xf32>
    %275 = arith.negf %274 : vector<8x128xf32>
    %276 = math.exp %275 : vector<8x128xf32>
    %cst_89 = arith.constant 1.000000e+00 : f32
    %277 = vector.broadcast %cst_89 : f32 to vector<8x128xf32>
    %278 = arith.addf %277, %276 : vector<8x128xf32>
    %279 = arith.divf %277, %278 : vector<8x128xf32>
    %280 = vector.extract_strided_slice %263 {offsets = [0, 256], sizes = [8, 128], strides = [1, 1]} : vector<8x384xf32> to vector<8x128xf32>
    %281 = vector.extract_strided_slice %260 {offsets = [0, 256], sizes = [8, 128], strides = [1, 1]} : vector<8x384xf32> to vector<8x128xf32>
    %c0_90 = arith.constant 0 : index
    %c0_91 = arith.constant 0 : index
    %282 = vector.load %arg6[%c0_90, %c0_91] : memref<1x128xf32, #tpu.memory_space<vmem>>, vector<1x128xf32>
    %283 = vector.broadcast %282 : vector<1x128xf32> to vector<8x128xf32>
    %284 = arith.addf %281, %283 : vector<8x128xf32>
    %285 = arith.mulf %271, %284 : vector<8x128xf32>
    %286 = arith.addf %280, %285 : vector<8x128xf32>
    %287 = math.tanh %286 : vector<8x128xf32>
    %cst_92 = arith.constant 1.000000e+00 : f32
    %288 = vector.broadcast %cst_92 : f32 to vector<8x128xf32>
    %289 = arith.subf %288, %279 : vector<8x128xf32>
    %290 = arith.mulf %289, %287 : vector<8x128xf32>
    %291 = arith.mulf %279, %257 : vector<8x128xf32>
    %292 = arith.addf %290, %291 : vector<8x128xf32>
    %c8_i32 = arith.constant 8 : i32
    %c0_93 = arith.constant 0 : index
    %c0_94 = arith.constant 0 : index
    %293 = vector.load %arg11[%c0_93, %c0_94] : memref<8x128xf32, #tpu.memory_space<vmem>>, vector<8x128xf32>
    tpu.vector_store %arg11[%c0_93, %c0_94], %292 {strides = array<i32>} : memref<8x128xf32, #tpu.memory_space<vmem>>, vector<8x128xf32>,
    %c0_i32_95 = arith.constant 0 : i32
    %294 = arith.cmpi eq, %arg1, %c0_i32_95 : i32
    %295 = arith.extui %294 : i1 to i32
    %c0_i32_96 = arith.constant 0 : i32
    %296 = arith.cmpi ne, %295, %c0_i32_96 : i32
    scf.if %296 {
      %c0_97 = arith.constant 0 : index
      %c0_98 = arith.constant 0 : index
      %297 = vector.load %arg7[%c0_97, %c0_98] : memref<128x128xf32, #tpu.memory_space<vmem>>, vector<128x128xf32>
      %cst_99 = arith.constant dense<0.000000e+00> : vector<8x128xf32>
      %298 = tpu.matmul %292, %297, %cst_99 {dimension_numbers = #tpu.dot_dimension_numbers<[1], [0], [0], [1], [0, 0, 1, 1], [], []>} : vector<8x128xf32>, vector<128x128xf32>, vector<8x128xf32> -> vector<8x128xf32>
      %c0_100 = arith.constant 0 : index
      %c0_101 = arith.constant 0 : index
      %299 = vector.load %arg8[%c0_100, %c0_101] : memref<1x128xf32, #tpu.memory_space<vmem>>, vector<1x128xf32>
      %300 = vector.broadcast %299 : vector<1x128xf32> to vector<8x128xf32>
      %301 = arith.addf %298, %300 : vector<8x128xf32>
      %c0_102 = arith.constant 0 : index
      %c0_103 = arith.constant 0 : index
      %302 = vector.load %arg9[%c0_102, %c0_103] : memref<8x128xf32, #tpu.memory_space<vmem>>, vector<8x128xf32>
      tpu.vector_store %arg9[%c0_102, %c0_103], %301 {strides = array<i32>} : memref<8x128xf32, #tpu.memory_space<vmem>>, vector<8x128xf32>,
    } else {
    }
    return
  }
  func.func @transform_0(%arg0: i32, %arg1: i32) -> (i32, i32, i32) {
    %c0_i32 = arith.constant 0 : i32
    %c0_i32_0 = arith.constant 0 : i32
    return %arg1, %arg0, %c0_i32 : i32, i32, i32
  }
  func.func @transform_1(%arg0: i32, %arg1: i32) -> (i32, i32) {
    %c0_i32 = arith.constant 0 : i32
    %c0_i32_0 = arith.constant 0 : i32
    %c0_i32_1 = arith.constant 0 : i32
    return %c0_i32, %c0_i32_0 : i32, i32
  }
  func.func @transform_2(%arg0: i32, %arg1: i32) -> (i32, i32) {
    %c0_i32 = arith.constant 0 : i32
    %c0_i32_0 = arith.constant 0 : i32
    %c0_i32_1 = arith.constant 0 : i32
    return %c0_i32, %c0_i32_0 : i32, i32
  }
  func.func @transform_3(%arg0: i32, %arg1: i32) -> (i32, i32) {
    %c0_i32 = arith.constant 0 : i32
    %c0_i32_0 = arith.constant 0 : i32
    %c0_i32_1 = arith.constant 0 : i32
    return %c0_i32, %c0_i32_0 : i32, i32
  }
  func.func @transform_4(%arg0: i32, %arg1: i32) -> (i32, i32) {
    %c0_i32 = arith.constant 0 : i32
    %c0_i32_0 = arith.constant 0 : i32
    %c0_i32_1 = arith.constant 0 : i32
    return %c0_i32, %c0_i32_0 : i32, i32
  }
  func.func @transform_5(%arg0: i32, %arg1: i32) -> (i32, i32) {
    %c0_i32 = arith.constant 0 : i32
    %c0_i32_0 = arith.constant 0 : i32
    %c0_i32_1 = arith.constant 0 : i32
    return %c0_i32, %c0_i32_0 : i32, i32
  }
  func.func @transform_6(%arg0: i32, %arg1: i32) -> (i32, i32) {
    %c0_i32 = arith.constant 0 : i32
    %c0_i32_0 = arith.constant 0 : i32
    %c0_i32_1 = arith.constant 0 : i32
    return %c0_i32, %c0_i32_0 : i32, i32
  }
  func.func @transform_7(%arg0: i32, %arg1: i32) -> (i32, i32) {
    %c0_i32 = arith.constant 0 : i32
    %c0_i32_0 = arith.constant 0 : i32
    return %arg0, %c0_i32 : i32, i32
  }
}

</mosaic_0001>

<llo_original>
// kernel: gru_model_forward.1
$region0: #{gru_model_forward.1}
  #allocation0 [shape = 'u32[]', space=smem, size = 0x4, offset = 0x4, fixed_abs, tag = 'smem constant byte address 0x4 - core index']
  #allocation1 [shape = 'u32[144,128]{1,0:T(1,128)}', space=vmem, size = 0x12000, scoped, tag = 'internal scratch']
  #allocation2 [shape = 'f32[8,8,384]{2,1,0:T(8,128)}', space=vmem, size = 0x18000, scoped, tag = 'scratch operand']
  #allocation3 [shape = 'f32[8,128]{1,0:T(8,128)}', space=vmem, size = 0x1000, scoped, tag = 'scratch operand']
  %s0 = inlined_call_operand.vmem [shape: f32[8,8,8], index: 0, kind: input, shape index: {}]
  %s1 = inlined_call_operand.vmem [shape: f32[8,384], index: 1, kind: input, shape index: {}]
  %s2 = inlined_call_operand.vmem [shape: f32[1,384], index: 2, kind: input, shape index: {}]
  %s3 = inlined_call_operand.vmem [shape: bf16[128,384], index: 3, kind: input, shape index: {}]
  %s4 = inlined_call_operand.vmem [shape: f32[1,128], index: 4, kind: input, shape index: {}]
  %s5 = inlined_call_operand.vmem [shape: f32[128,128], index: 5, kind: input, shape index: {}]
  %s6 = inlined_call_operand.vmem [shape: f32[1,128], index: 6, kind: input, shape index: {}]
  %s7 = inlined_call_operand.vmem [shape: f32[8,128], index: 7, kind: output, shape index: {}]
  %s8 = sld [smem:[#allocation0]]
  $region46: #{gru_model_forward.1} parent=0
    _
  %s10 = ssub.s32 1, %s8
  %s11 = scalar_select 0, %s10, %s8
  // Predicated region
  $region2: #{gru_model_forward.1} parent=0 // pred_check
    _
  $region3: #{gru_model_forward.1} parent=0 // pred_check_branch
    %13 = sbr.rel (0) target = $region5
  $region4: #{gru_model_forward.1} parent=0 // pred_region
    _
  $region5: #{gru_model_forward.1} parent=0 // pred_fallthru
    _
  // Predicated region
  $region6: #{gru_model_forward.1} parent=0 // pred_check
    _
  $region7: #{gru_model_forward.1} parent=0 // pred_check_branch
    %15 = sbr.rel (0) target = $region9
  $region8: #{gru_model_forward.1} parent=0 // pred_region
    _
  $region9: #{gru_model_forward.1} parent=0 // pred_fallthru
    _
  // Predicated region
  $region10: #{gru_model_forward.1} parent=0 // pred_check
    _
  $region11: #{gru_model_forward.1} parent=0 // pred_check_branch
    %17 = sbr.rel (0) target = $region13
  $region12: #{gru_model_forward.1} parent=0 // pred_region
    _
  $region13: #{gru_model_forward.1} parent=0 // pred_fallthru
    _
  // Predicated region
  $region14: #{gru_model_forward.1} parent=0 // pred_check
    _
  $region15: #{gru_model_forward.1} parent=0 // pred_check_branch
    %19 = sbr.rel (0) target = $region17
  $region16: #{gru_model_forward.1} parent=0 // pred_region
    _
  $region17: #{gru_model_forward.1} parent=0 // pred_fallthru
    _
  // Predicated region
  $region18: #{gru_model_forward.1} parent=0 // pred_check
    _
  $region19: #{gru_model_forward.1} parent=0 // pred_check_branch
    %21 = sbr.rel (0) target = $region21
  $region20: #{gru_model_forward.1} parent=0 // pred_region
    _
  $region21: #{gru_model_forward.1} parent=0 // pred_fallthru
    _
  // Predicated region
  $region22: #{gru_model_forward.1} parent=0 // pred_check
    _
  $region23: #{gru_model_forward.1} parent=0 // pred_check_branch
    %23 = sbr.rel (0) target = $region25
  $region24: #{gru_model_forward.1} parent=0 // pred_region
    _
  $region25: #{gru_model_forward.1} parent=0 // pred_fallthru
    _
  // Predicated region
  $region26: #{gru_model_forward.1} parent=0 // pred_check
    _
  $region27: #{gru_model_forward.1} parent=0 // pred_check_branch
    %25 = sbr.rel (0) target = $region29
  $region28: #{gru_model_forward.1} parent=0 // pred_region
    _
  $region29: #{gru_model_forward.1} parent=0 // pred_fallthru
    _
  %p27 = scmp.eq.s32.totalorder 0, 0
  // Predicated region
  $region30: #{gru_model_forward.1} parent=0 // pred_check
    %p28 = pneg %p27
  $region31: #{gru_model_forward.1} parent=0 // pred_check_branch
    %30 = sbr.rel (%p28) target = $region33
  $region32: #{gru_model_forward.1} parent=0 // pred_region
    %31 = vst [vmem:[#allocation3] sm:$0xff] 0.0
  $region33: #{gru_model_forward.1} parent=0 // pred_fallthru
    _
  %v32 = vld [vmem:[%s0] sm:$0xff]
  %v33 = vld [vmem:[%s0 + $0x8] sm:$0xff]
  %v34 = vld [vmem:[%s0 + $0x10] sm:$0xff]
  %v35 = vld [vmem:[%s0 + $0x18] sm:$0xff]
  %v36 = vld [vmem:[%s0 + $0x20] sm:$0xff]
  %v37 = vld [vmem:[%s0 + $0x28] sm:$0xff]
  %v38 = vld [vmem:[%s0 + $0x30] sm:$0xff]
  %v39 = vld [vmem:[%s0 + $0x38] sm:$0xff]
  %v40 = vld [vmem:[%s1] sm:$0xff]
  %v41 = vld [vmem:[%s1 + $0x8] sm:$0xff]
  %v42 = vld [vmem:[%s1 + $0x10] sm:$0xff]
  %v43 = vld [vmem:[%s2] sm:$0x7]
  %v45 = vlaneseq
  %v46 = vshrl.u32 %v45, 7
  %v47 = vsub.s32 0, %v46
  %v48 = vrot.slane %v43, %v47
  %v49 = vlaneseq
  %v50 = vshrl.u32 %v49, 7
  %v51 = vsub.s32 1, %v50
  %v52 = vrot.slane %v43, %v51
  %v53 = vlaneseq
  %v54 = vshrl.u32 %v53, 7
  %v55 = vsub.s32 2, %v54
  %v56 = vrot.slane %v43, %v55
  %vm60 = vcmask 64512
  %v62 = vsel %vm60, %v32, 0
  %v65 = vsel %vm60, %v33, 0
  %v68 = vsel %vm60, %v34, 0
  %v71 = vsel %vm60, %v35, 0
  %v74 = vsel %vm60, %v36, 0
  %v77 = vsel %vm60, %v37, 0
  %v80 = vsel %vm60, %v38, 0
  %v83 = vsel %vm60, %v39, 0
  %85 = vmatprep.subr.mxu0 0.0
  %86 = vmatpush1.msra.mxu0 0.0
  %87 = vmatprep.subr.mxu0 0.0
  %88 = vmatpush1.msra.mxu0 0.0
  %89 = vmatprep.subr.mxu0 0.0
  %90 = vmatpush1.msra.mxu0 0.0
  %91 = vmatprep.subr.mxu0 0.0
  %92 = vmatpush1.msra.mxu0 0.0
  %93 = vmatprep.subr.mxu0 0.0
  %94 = vmatpush1.msra.mxu0 0.0
  %95 = vmatprep.subr.mxu0 0.0
  %96 = vmatpush1.msra.mxu0 0.0
  %97 = vmatprep.subr.mxu0 0.0
  %98 = vmatpush1.msra.mxu0 0.0
  %99 = vmatprep.subr.mxu0 0.0
  %100 = vmatpush1.msra.mxu0 0.0
  %101 = vmatprep.subr.mxu0 0.0
  %102 = vmatpush1.msra.mxu0 0.0
  %103 = vmatprep.subr.mxu0 0.0
  %104 = vmatpush1.msra.mxu0 0.0
  %105 = vmatprep.subr.mxu0 0.0
  %106 = vmatpush1.msra.mxu0 0.0
  %107 = vmatprep.subr.mxu0 0.0
  %108 = vmatpush1.msra.mxu0 0.0
  %109 = vmatprep.subr.mxu0 0.0
  %110 = vmatpush1.msra.mxu0 0.0
  %111 = vmatprep.subr.mxu0 0.0
  %112 = vmatpush1.msra.mxu0 0.0
  %113 = vmatprep.subr.mxu0 0.0
  %114 = vmatpush1.msra.mxu0 0.0
  %115 = vmatprep.subr.mxu0 %v41
  %116 = vmatpush1.msra.mxu0 %v40
  %117 = vmatprep.subr.mxu0 0.0
  %118 = vmatpush2.msra.mxu0 0.0
  %119 = vmatprep.subr.mxu0 0.0
  %120 = vmatpush2.msra.mxu0 0.0
  %121 = vmatprep.subr.mxu0 0.0
  %122 = vmatpush2.msra.mxu0 0.0
  %123 = vmatprep.subr.mxu0 0.0
  %124 = vmatpush2.msra.mxu0 0.0
  %125 = vmatprep.subr.mxu0 0.0
  %126 = vmatpush2.msra.mxu0 0.0
  %127 = vmatprep.subr.mxu0 0.0
  %128 = vmatpush2.msra.mxu0 0.0
  %129 = vmatprep.subr.mxu0 0.0
  %130 = vmatpush2.msra.mxu0 0.0
  %131 = vmatprep.subr.mxu0 0.0
  %132 = vmatpush2.msra.mxu0 0.0
  %133 = vmatprep.subr.mxu0 0.0
  %134 = vmatpush2.msra.mxu0 0.0
  %135 = vmatprep.subr.mxu0 0.0
  %136 = vmatpush2.msra.mxu0 0.0
  %137 = vmatprep.subr.mxu0 0.0
  %138 = vmatpush2.msra.mxu0 0.0
  %139 = vmatprep.subr.mxu0 0.0
  %140 = vmatpush2.msra.mxu0 0.0
  %141 = vmatprep.subr.mxu0 0.0
  %142 = vmatpush2.msra.mxu0 0.0
  %143 = vmatprep.subr.mxu0 0.0
  %144 = vmatpush2.msra.mxu0 0.0
  %145 = vmatprep.subr.mxu0 0.0
  %146 = vmatpush2.msra.mxu0 0.0
  %147 = vmatprep.subr.mxu0 0.0
  %148 = vmatpush2.msra.mxu0 0.0
  %149 = vmatprep.mubr.f32.mxu0 0.0
  %150 = vmatmul.mubr.f32.gmra.mxu0 %v62
  %v151 = vpop.f32.mrf.mxu0
  %v152 = vadd.f32 %v48, %v151
  %v153 = vpop.f32.mrf.mxu0
  %v154 = vadd.f32 %v52, %v153
  %155 = vmatprep.mubr.f32.mxu0 0.0
  %156 = vmatmul.mubr.f32.gmra.mxu0 %v65
  %v157 = vpop.f32.mrf.mxu0
  %v158 = vadd.f32 %v48, %v157
  %v159 = vpop.f32.mrf.mxu0
  %v160 = vadd.f32 %v52, %v159
  %161 = vmatprep.mubr.f32.mxu0 0.0
  %162 = vmatmul.mubr.f32.gmra.mxu0 %v68
  %v163 = vpop.f32.mrf.mxu0
  %v164 = vadd.f32 %v48, %v163
  %v165 = vpop.f32.mrf.mxu0
  %v166 = vadd.f32 %v52, %v165
  %167 = vmatprep.mubr.f32.mxu0 0.0
  %168 = vmatmul.mubr.f32.gmra.mxu0 %v71
  %v169 = vpop.f32.mrf.mxu0
  %v170 = vadd.f32 %v48, %v169
  %v171 = vpop.f32.mrf.mxu0
  %v172 = vadd.f32 %v52, %v171
  %173 = vmatprep.mubr.f32.mxu0 0.0
  %174 = vmatmul.mubr.f32.gmra.mxu0 %v74
  %v175 = vpop.f32.mrf.mxu0
  %v176 = vadd.f32 %v48, %v175
  %v177 = vpop.f32.mrf.mxu0
  %v178 = vadd.f32 %v52, %v177
  %179 = vmatprep.mubr.f32.mxu0 0.0
  %180 = vmatmul.mubr.f32.gmra.mxu0 %v77
  %v181 = vpop.f32.mrf.mxu0
  %v182 = vadd.f32 %v48, %v181
  %v183 = vpop.f32.mrf.mxu0
  %v184 = vadd.f32 %v52, %v183
  %185 = vmatprep.mubr.f32.mxu0 0.0
  %186 = vmatmul.mubr.f32.gmra.mxu0 %v80
  %v187 = vpop.f32.mrf.mxu0
  %v188 = vadd.f32 %v48, %v187
  %v189 = vpop.f32.mrf.mxu0
  %v190 = vadd.f32 %v52, %v189
  %191 = vmatprep.mubr.f32.mxu0 0.0
  %192 = vmatmul.mubr.f32.gmra.mxu0 %v83
  %v193 = vpop.f32.mrf.mxu0
  %v194 = vadd.f32 %v48, %v193
  %v195 = vpop.f32.mrf.mxu0
  %v196 = vadd.f32 %v52, %v195
  %197 = vdwg.mxu0
  %198 = vmatprep.subr.mxu0 0.0
  %199 = vmatpush1.msra.mxu0 0.0
  %200 = vmatprep.subr.mxu0 0.0
  %201 = vmatpush1.msra.mxu0 0.0
  %202 = vmatprep.subr.mxu0 0.0
  %203 = vmatpush1.msra.mxu0 0.0
  %204 = vmatprep.subr.mxu0 0.0
  %205 = vmatpush1.msra.mxu0 0.0
  %206 = vmatprep.subr.mxu0 0.0
  %207 = vmatpush1.msra.mxu0 0.0
  %208 = vmatprep.subr.mxu0 0.0
  %209 = vmatpush1.msra.mxu0 0.0
  %210 = vmatprep.subr.mxu0 0.0
  %211 = vmatpush1.msra.mxu0 0.0
  %212 = vmatprep.subr.mxu0 0.0
  %213 = vmatpush1.msra.mxu0 0.0
  %214 = vmatprep.subr.mxu0 0.0
  %215 = vmatpush1.msra.mxu0 0.0
  %216 = vmatprep.subr.mxu0 0.0
  %217 = vmatpush1.msra.mxu0 0.0
  %218 = vmatprep.subr.mxu0 0.0
  %219 = vmatpush1.msra.mxu0 0.0
  %220 = vmatprep.subr.mxu0 0.0
  %221 = vmatpush1.msra.mxu0 0.0
  %222 = vmatprep.subr.mxu0 0.0
  %223 = vmatpush1.msra.mxu0 0.0
  %224 = vmatprep.subr.mxu0 0.0
  %225 = vmatpush1.msra.mxu0 0.0
  %226 = vmatprep.subr.mxu0 0.0
  %227 = vmatpush1.msra.mxu0 0.0
  %228 = vmatprep.subr.mxu0 0.0
  %229 = vmatpush1.msra.mxu0 %v42
  %230 = vmatprep.subr.mxu0 0.0
  %231 = vmatpush2.msra.mxu0 0.0
  %232 = vmatprep.subr.mxu0 0.0
  %233 = vmatpush2.msra.mxu0 0.0
  %234 = vmatprep.subr.mxu0 0.0
  %235 = vmatpush2.msra.mxu0 0.0
  %236 = vmatprep.subr.mxu0 0.0
  %237 = vmatpush2.msra.mxu0 0.0
  %238 = vmatprep.subr.mxu0 0.0
  %239 = vmatpush2.msra.mxu0 0.0
  %240 = vmatprep.subr.mxu0 0.0
  %241 = vmatpush2.msra.mxu0 0.0
  %242 = vmatprep.subr.mxu0 0.0
  %243 = vmatpush2.msra.mxu0 0.0
  %244 = vmatprep.subr.mxu0 0.0
  %245 = vmatpush2.msra.mxu0 0.0
  %246 = vmatprep.subr.mxu0 0.0
  %247 = vmatpush2.msra.mxu0 0.0
  %248 = vmatprep.subr.mxu0 0.0
  %249 = vmatpush2.msra.mxu0 0.0
  %250 = vmatprep.subr.mxu0 0.0
  %251 = vmatpush2.msra.mxu0 0.0
  %252 = vmatprep.subr.mxu0 0.0
  %253 = vmatpush2.msra.mxu0 0.0
  %254 = vmatprep.subr.mxu0 0.0
  %255 = vmatpush2.msra.mxu0 0.0
  %256 = vmatprep.subr.mxu0 0.0
  %257 = vmatpush2.msra.mxu0 0.0
  %258 = vmatprep.subr.mxu0 0.0
  %259 = vmatpush2.msra.mxu0 0.0
  %260 = vmatprep.subr.mxu0 0.0
  %261 = vmatpush2.msra.mxu0 0.0
  %262 = vmatprep.mubr.f32.mxu0 0.0
  %263 = vmatmul.mubr.f32.gmra.mxu0 %v62
  %v264 = vpop.f32.mrf.mxu0
  %v265 = vadd.f32 %v56, %v264
  %v266 = vpop.f32.mrf.mxu0
  %267 = vmatprep.mubr.f32.mxu0 0.0
  %268 = vmatmul.mubr.f32.gmra.mxu0 %v65
  %v269 = vpop.f32.mrf.mxu0
  %v270 = vadd.f32 %v56, %v269
  %v271 = vpop.f32.mrf.mxu0
  %272 = vmatprep.mubr.f32.mxu0 0.0
  %273 = vmatmul.mubr.f32.gmra.mxu0 %v68
  %v274 = vpop.f32.mrf.mxu0
  %v275 = vadd.f32 %v56, %v274
  %v276 = vpop.f32.mrf.mxu0
  %277 = vmatprep.mubr.f32.mxu0 0.0
  %278 = vmatmul.mubr.f32.gmra.mxu0 %v71
  %v279 = vpop.f32.mrf.mxu0
  %v280 = vadd.f32 %v56, %v279
  %v281 = vpop.f32.mrf.mxu0
  %282 = vmatprep.mubr.f32.mxu0 0.0
  %283 = vmatmul.mubr.f32.gmra.mxu0 %v74
  %v284 = vpop.f32.mrf.mxu0
  %v285 = vadd.f32 %v56, %v284
  %v286 = vpop.f32.mrf.mxu0
  %287 = vmatprep.mubr.f32.mxu0 0.0
  %288 = vmatmul.mubr.f32.gmra.mxu0 %v77
  %v289 = vpop.f32.mrf.mxu0
  %v290 = vadd.f32 %v56, %v289
  %v291 = vpop.f32.mrf.mxu0
  %292 = vmatprep.mubr.f32.mxu0 0.0
  %293 = vmatmul.mubr.f32.gmra.mxu0 %v80
  %v294 = vpop.f32.mrf.mxu0
  %v295 = vadd.f32 %v56, %v294
  %v296 = vpop.f32.mrf.mxu0
  %297 = vmatprep.mubr.f32.mxu0 0.0
  %298 = vmatmul.mubr.f32.gmra.mxu0 %v83
  %v299 = vpop.f32.mrf.mxu0
  %v300 = vadd.f32 %v56, %v299
  %v301 = vpop.f32.mrf.mxu0
  %302 = vdwg.mxu0
  %303 = vst [vmem:[#allocation2] sm:$0xff] %v152
  %304 = vst [vmem:[#allocation2 + $0x8] sm:$0xff] %v154
  %305 = vst [vmem:[#allocation2 + $0x10] sm:$0xff] %v265
  %306 = vst [vmem:[#allocation2 + $0x18] sm:$0xff] %v158
  %307 = vst [vmem:[#allocation2 + $0x20] sm:$0xff] %v160
  %308 = vst [vmem:[#allocation2 + $0x28] sm:$0xff] %v270
  %309 = vst [vmem:[#allocation2 + $0x30] sm:$0xff] %v164
  %310 = vst [vmem:[#allocation2 + $0x38] sm:$0xff] %v166
  %311 = vst [vmem:[#allocation2 + $0x40] sm:$0xff] %v275
  %312 = vst [vmem:[#allocation2 + $0x48] sm:$0xff] %v170
  %313 = vst [vmem:[#allocation2 + $0x50] sm:$0xff] %v172
  %314 = vst [vmem:[#allocation2 + $0x58] sm:$0xff] %v280
  %315 = vst [vmem:[#allocation2 + $0x60] sm:$0xff] %v176
  %316 = vst [vmem:[#allocation2 + $0x68] sm:$0xff] %v178
  %317 = vst [vmem:[#allocation2 + $0x70] sm:$0xff] %v285
  %318 = vst [vmem:[#allocation2 + $0x78] sm:$0xff] %v182
  %319 = vst [vmem:[#allocation2 + $0x80] sm:$0xff] %v184
  %320 = vst [vmem:[#allocation2 + $0x88] sm:$0xff] %v290
  %321 = vst [vmem:[#allocation2 + $0x90] sm:$0xff] %v188
  %322 = vst [vmem:[#allocation2 + $0x98] sm:$0xff] %v190
  %323 = vst [vmem:[#allocation2 + $0xa0] sm:$0xff] %v295
  %324 = vst [vmem:[#allocation2 + $0xa8] sm:$0xff] %v194
  %325 = vst [vmem:[#allocation2 + $0xb0] sm:$0xff] %v196
  %326 = vst [vmem:[#allocation2 + $0xb8] sm:$0xff] %v300
  %v327 = vld [vmem:[#allocation3] sm:$0xff]
  %v328 = vpack.c.bf16 %v327, %v327
  %v329 = vld [vmem:[%s3] sm:$0xff]
  %v330 = vld [vmem:[%s3 + $0x8] sm:$0xf]
  %v331 = vld [vmem:[%s3 + $0xc] sm:$0xff]
  %v332 = vld [vmem:[%s3 + $0x14] sm:$0xf]
  %v333 = vld [vmem:[%s3 + $0x18] sm:$0xff]
  %v334 = vld [vmem:[%s3 + $0x20] sm:$0xf]
  %v335 = vld [vmem:[%s3 + $0x24] sm:$0xff]
  %v336 = vld [vmem:[%s3 + $0x2c] sm:$0xf]
  %v337 = vld [vmem:[%s3 + $0x30] sm:$0xff]
  %v338 = vld [vmem:[%s3 + $0x38] sm:$0xf]
  %v339 = vld [vmem:[%s3 + $0x3c] sm:$0xff]
  %v340 = vld [vmem:[%s3 + $0x44] sm:$0xf]
  %v341 = vld [vmem:[%s3 + $0x48] sm:$0xff]
  %v342 = vld [vmem:[%s3 + $0x50] sm:$0xf]
  %v343 = vld [vmem:[%s3 + $0x54] sm:$0xff]
  %v344 = vld [vmem:[%s3 + $0x5c] sm:$0xf]
  %v345 = vld [vmem:[%s3 + $0x60] sm:$0xff]
  %v346 = vld [vmem:[%s3 + $0x68] sm:$0xf]
  %v347 = vld [vmem:[%s3 + $0x6c] sm:$0xff]
  %v348 = vld [vmem:[%s3 + $0x74] sm:$0xf]
  %v349 = vld [vmem:[%s3 + $0x78] sm:$0xff]
  %v350 = vld [vmem:[%s3 + $0x80] sm:$0xf]
  %v351 = vld [vmem:[%s3 + $0x84] sm:$0xff]
  %v352 = vld [vmem:[%s3 + $0x8c] sm:$0xf]
  %v353 = vld [vmem:[%s3 + $0x90] sm:$0xff]
  %v354 = vld [vmem:[%s3 + $0x98] sm:$0xf]
  %v355 = vld [vmem:[%s3 + $0x9c] sm:$0xff]
  %v356 = vld [vmem:[%s3 + $0xa4] sm:$0xf]
  %v357 = vld [vmem:[%s3 + $0xa8] sm:$0xff]
  %v358 = vld [vmem:[%s3 + $0xb0] sm:$0xf]
  %v359 = vld [vmem:[%s3 + $0xb4] sm:$0xff]
  %v360 = vld [vmem:[%s3 + $0xbc] sm:$0xf]
  %v393 = vunpack.c.l.b16 %v329
  %v394 = vunpack.c.h.b16 %v329
  %v395 = vunpack.c.l.b16 %v330
  %v396 = vunpack.c.l.b16 %v331
  %v397 = vunpack.c.h.b16 %v331
  %v398 = vunpack.c.l.b16 %v332
  %v399 = vunpack.c.l.b16 %v333
  %v400 = vunpack.c.h.b16 %v333
  %v401 = vunpack.c.l.b16 %v334
  %v402 = vunpack.c.l.b16 %v335
  %v403 = vunpack.c.h.b16 %v335
  %v404 = vunpack.c.l.b16 %v336
  %v405 = vunpack.c.l.b16 %v337
  %v406 = vunpack.c.h.b16 %v337
  %v407 = vunpack.c.l.b16 %v338
  %v408 = vunpack.c.l.b16 %v339
  %v409 = vunpack.c.h.b16 %v339
  %v410 = vunpack.c.l.b16 %v340
  %v411 = vunpack.c.l.b16 %v341
  %v412 = vunpack.c.h.b16 %v341
  %v413 = vunpack.c.l.b16 %v342
  %v414 = vunpack.c.l.b16 %v343
  %v415 = vunpack.c.h.b16 %v343
  %v416 = vunpack.c.l.b16 %v344
  %v417 = vunpack.c.l.b16 %v345
  %v418 = vunpack.c.h.b16 %v345
  %v419 = vunpack.c.l.b16 %v346
  %v420 = vunpack.c.l.b16 %v347
  %v421 = vunpack.c.h.b16 %v347
  %v422 = vunpack.c.l.b16 %v348
  %v423 = vunpack.c.l.b16 %v349
  %v424 = vunpack.c.h.b16 %v349
  %v425 = vunpack.c.l.b16 %v350
  %v426 = vunpack.c.l.b16 %v351
  %v427 = vunpack.c.h.b16 %v351
  %v428 = vunpack.c.l.b16 %v352
  %v429 = vunpack.c.l.b16 %v353
  %v430 = vunpack.c.h.b16 %v353
  %v431 = vunpack.c.l.b16 %v354
  %v432 = vunpack.c.l.b16 %v355
  %v433 = vunpack.c.h.b16 %v355
  %v434 = vunpack.c.l.b16 %v356
  %v435 = vunpack.c.l.b16 %v357
  %v436 = vunpack.c.h.b16 %v357
  %v437 = vunpack.c.l.b16 %v358
  %v438 = vunpack.c.l.b16 %v359
  %v439 = vunpack.c.h.b16 %v359
  %v440 = vunpack.c.l.b16 %v360
  %v441 = vpack.c.b16 %v396, %v393
  %v442 = vpack.c.b16 %v397, %v394
  %v443 = vpack.c.b16 %v398, %v395
  %v444 = vpack.c.b16 %v402, %v399
  %v445 = vpack.c.b16 %v403, %v400
  %v446 = vpack.c.b16 %v404, %v401
  %v447 = vpack.c.b16 %v408, %v405
  %v448 = vpack.c.b16 %v409, %v406
  %v449 = vpack.c.b16 %v410, %v407
  %v450 = vpack.c.b16 %v414, %v411
  %v451 = vpack.c.b16 %v415, %v412
  %v452 = vpack.c.b16 %v416, %v413
  %v453 = vpack.c.b16 %v420, %v417
  %v454 = vpack.c.b16 %v421, %v418
  %v455 = vpack.c.b16 %v422, %v419
  %v456 = vpack.c.b16 %v426, %v423
  %v457 = vpack.c.b16 %v427, %v424
  %v458 = vpack.c.b16 %v428, %v425
  %v459 = vpack.c.b16 %v432, %v429
  %v460 = vpack.c.b16 %v433, %v430
  %v461 = vpack.c.b16 %v434, %v431
  %v462 = vpack.c.b16 %v438, %v435
  %v463 = vpack.c.b16 %v439, %v436
  %v464 = vpack.c.b16 %v440, %v437
  %489 = vmatprep.subr.bf16.mxu0 %v463
  %490 = vmatpush1.bf16.msra.mxu0 %v462
  %491 = vmatprep.subr.bf16.mxu0 %v460
  %492 = vmatpush1.bf16.msra.mxu0 %v459
  %493 = vmatprep.subr.bf16.mxu0 %v457
  %494 = vmatpush1.bf16.msra.mxu0 %v456
  %495 = vmatprep.subr.bf16.mxu0 %v454
  %496 = vmatpush1.bf16.msra.mxu0 %v453
  %497 = vmatprep.subr.bf16.mxu0 %v451
  %498 = vmatpush1.bf16.msra.mxu0 %v450
  %499 = vmatprep.subr.bf16.mxu0 %v448
  %500 = vmatpush1.bf16.msra.mxu0 %v447
  %501 = vmatprep.subr.bf16.mxu0 %v445
  %502 = vmatpush1.bf16.msra.mxu0 %v444
  %503 = vmatprep.subr.bf16.mxu0 %v442
  %504 = vmatpush1.bf16.msra.mxu0 %v441
  %505 = vmatprep.subr.bf16.mxu0 0
  %506 = vmatpush2.bf16.msra.mxu0 0
  %507 = vmatprep.subr.bf16.mxu0 0
  %508 = vmatpush2.bf16.msra.mxu0 0
  %509 = vmatprep.subr.bf16.mxu0 0
  %510 = vmatpush2.bf16.msra.mxu0 0
  %511 = vmatprep.subr.bf16.mxu0 0
  %512 = vmatpush2.bf16.msra.mxu0 0
  %513 = vmatprep.subr.bf16.mxu0 0
  %514 = vmatpush2.bf16.msra.mxu0 0
  %515 = vmatprep.subr.bf16.mxu0 0
  %516 = vmatpush2.bf16.msra.mxu0 0
  %517 = vmatprep.subr.bf16.mxu0 0
  %518 = vmatpush2.bf16.msra.mxu0 0
  %519 = vmatprep.subr.bf16.mxu0 0
  %520 = vmatpush2.bf16.msra.mxu0 0
  %521 = vmatprep.mubr.bf16.mxu0 0
  %522 = vmatmul.mubr.bf16.gmra.mxu0 %v328
  %v523 = vpop.f32.mrf.mxu0
  %v524 = vadd.f32 0.0, %v523
  %v525 = vpop.f32.mrf.mxu0
  %v526 = vadd.f32 0.0, %v525
  %v527 = vpop.f32.mrf.mxu0
  %v528 = vpop.f32.mrf.mxu0
  %529 = vdwg.mxu0
  %530 = vmatprep.subr.bf16.mxu0 0
  %531 = vmatpush1.bf16.msra.mxu0 %v464
  %532 = vmatprep.subr.bf16.mxu0 0
  %533 = vmatpush1.bf16.msra.mxu0 %v461
  %534 = vmatprep.subr.bf16.mxu0 0
  %535 = vmatpush1.bf16.msra.mxu0 %v458
  %536 = vmatprep.subr.bf16.mxu0 0
  %537 = vmatpush1.bf16.msra.mxu0 %v455
  %538 = vmatprep.subr.bf16.mxu0 0
  %539 = vmatpush1.bf16.msra.mxu0 %v452
  %540 = vmatprep.subr.bf16.mxu0 0
  %541 = vmatpush1.bf16.msra.mxu0 %v449
  %542 = vmatprep.subr.bf16.mxu0 0
  %543 = vmatpush1.bf16.msra.mxu0 %v446
  %544 = vmatprep.subr.bf16.mxu0 0
  %545 = vmatpush1.bf16.msra.mxu0 %v443
  %546 = vmatprep.subr.bf16.mxu0 0
  %547 = vmatpush2.bf16.msra.mxu0 0
  %548 = vmatprep.subr.bf16.mxu0 0
  %549 = vmatpush2.bf16.msra.mxu0 0
  %550 = vmatprep.subr.bf16.mxu0 0
  %551 = vmatpush2.bf16.msra.mxu0 0
  %552 = vmatprep.subr.bf16.mxu0 0
  %553 = vmatpush2.bf16.msra.mxu0 0
  %554 = vmatprep.subr.bf16.mxu0 0
  %555 = vmatpush2.bf16.msra.mxu0 0
  %556 = vmatprep.subr.bf16.mxu0 0
  %557 = vmatpush2.bf16.msra.mxu0 0
  %558 = vmatprep.subr.bf16.mxu0 0
  %559 = vmatpush2.bf16.msra.mxu0 0
  %560 = vmatprep.subr.bf16.mxu0 0
  %561 = vmatpush2.bf16.msra.mxu0 0
  %562 = vmatprep.mubr.bf16.mxu0 0
  %563 = vmatmul.mubr.bf16.gmra.mxu0 %v328
  %v564 = vpop.f32.mrf.mxu0
  %v565 = vadd.f32 0.0, %v564
  %v566 = vpop.f32.mrf.mxu0
  %v567 = vpop.f32.mrf.mxu0
  %v568 = vpop.f32.mrf.mxu0
  %569 = vdwg.mxu0
  %v570 = vld [vmem:[#allocation2] sm:$0xff]
  %v571 = vld [vmem:[#allocation2 + $0x8] sm:$0xff]
  %v572 = vld [vmem:[#allocation2 + $0x10] sm:$0xff]
  %v573 = vadd.f32 %v570, %v524
  %v574 = vxor.u32 %v573, 2147483648
  %v575 = vmul.f32 %v574, 1.442695
  %v576 = vpow.pop %v575
  %v577 = vadd.f32 %v576, 1.0
  %v578 = vrcp.pop %v577
  %v579 = vmul.f32 1.0, %v578
  %v580 = vadd.f32 %v571, %v526
  %v581 = vxor.u32 %v580, 2147483648
  %v582 = vmul.f32 %v581, 1.442695
  %v583 = vpow.pop %v582
  %v584 = vadd.f32 %v583, 1.0
  %v585 = vrcp.pop %v584
  %v586 = vmul.f32 1.0, %v585
  %v587 = vld [vmem:[%s4] sm:$0x1]
  %v589 = vlaneseq
  %v590 = vshrl.u32 %v589, 7
  %v591 = vsub.s32 0, %v590
  %v592 = vrot.slane %v587, %v591
  %v594 = vadd.f32 %v565, %v592
  %v595 = vmul.f32 %v579, %v594
  %v596 = vadd.f32 %v572, %v595
  %v597 = vtanh.pop %v596
  %v598 = vsub.f32 1.0, %v586
  %v599 = vmul.f32 %v598, %v597
  %v600 = vmul.f32 %v586, %v327
  %v601 = vadd.f32 %v599, %v600
  %v602 = vpack.c.bf16 %v601, %v601
  %603 = vmatprep.subr.bf16.mxu0 %v463
  %604 = vmatpush1.bf16.msra.mxu0 %v462
  %605 = vmatprep.subr.bf16.mxu0 %v460
  %606 = vmatpush1.bf16.msra.mxu0 %v459
  %607 = vmatprep.subr.bf16.mxu0 %v457
  %608 = vmatpush1.bf16.msra.mxu0 %v456
  %609 = vmatprep.subr.bf16.mxu0 %v454
  %610 = vmatpush1.bf16.msra.mxu0 %v453
  %611 = vmatprep.subr.bf16.mxu0 %v451
  %612 = vmatpush1.bf16.msra.mxu0 %v450
  %613 = vmatprep.subr.bf16.mxu0 %v448
  %614 = vmatpush1.bf16.msra.mxu0 %v447
  %615 = vmatprep.subr.bf16.mxu0 %v445
  %616 = vmatpush1.bf16.msra.mxu0 %v444
  %617 = vmatprep.subr.bf16.mxu0 %v442
  %618 = vmatpush1.bf16.msra.mxu0 %v441
  %619 = vmatprep.subr.bf16.mxu0 0
  %620 = vmatpush2.bf16.msra.mxu0 0
  %621 = vmatprep.subr.bf16.mxu0 0
  %622 = vmatpush2.bf16.msra.mxu0 0
  %623 = vmatprep.subr.bf16.mxu0 0
  %624 = vmatpush2.bf16.msra.mxu0 0
  %625 = vmatprep.subr.bf16.mxu0 0
  %626 = vmatpush2.bf16.msra.mxu0 0
  %627 = vmatprep.subr.bf16.mxu0 0
  %628 = vmatpush2.bf16.msra.mxu0 0
  %629 = vmatprep.subr.bf16.mxu0 0
  %630 = vmatpush2.bf16.msra.mxu0 0
  %631 = vmatprep.subr.bf16.mxu0 0
  %632 = vmatpush2.bf16.msra.mxu0 0
  %633 = vmatprep.subr.bf16.mxu0 0
  %634 = vmatpush2.bf16.msra.mxu0 0
  %635 = vmatprep.mubr.bf16.mxu0 0
  %636 = vmatmul.mubr.bf16.gmra.mxu0 %v602
  %v637 = vpop.f32.mrf.mxu0
  %v638 = vadd.f32 0.0, %v637
  %v639 = vpop.f32.mrf.mxu0
  %v640 = vadd.f32 0.0, %v639
  %v641 = vpop.f32.mrf.mxu0
  %v642 = vpop.f32.mrf.mxu0
  %643 = vdwg.mxu0
  %644 = vmatprep.subr.bf16.mxu0 0
  %645 = vmatpush1.bf16.msra.mxu0 %v464
  %646 = vmatprep.subr.bf16.mxu0 0
  %647 = vmatpush1.bf16.msra.mxu0 %v461
  %648 = vmatprep.subr.bf16.mxu0 0
  %649 = vmatpush1.bf16.msra.mxu0 %v458
  %650 = vmatprep.subr.bf16.mxu0 0
  %651 = vmatpush1.bf16.msra.mxu0 %v455
  %652 = vmatprep.subr.bf16.mxu0 0
  %653 = vmatpush1.bf16.msra.mxu0 %v452
  %654 = vmatprep.subr.bf16.mxu0 0
  %655 = vmatpush1.bf16.msra.mxu0 %v449
  %656 = vmatprep.subr.bf16.mxu0 0
  %657 = vmatpush1.bf16.msra.mxu0 %v446
  %658 = vmatprep.subr.bf16.mxu0 0
  %659 = vmatpush1.bf16.msra.mxu0 %v443
  %660 = vmatprep.subr.bf16.mxu0 0
  %661 = vmatpush2.bf16.msra.mxu0 0
  %662 = vmatprep.subr.bf16.mxu0 0
  %663 = vmatpush2.bf16.msra.mxu0 0
  %664 = vmatprep.subr.bf16.mxu0 0
  %665 = vmatpush2.bf16.msra.mxu0 0
  %666 = vmatprep.subr.bf16.mxu0 0
  %667 = vmatpush2.bf16.msra.mxu0 0
  %668 = vmatprep.subr.bf16.mxu0 0
  %669 = vmatpush2.bf16.msra.mxu0 0
  %670 = vmatprep.subr.bf16.mxu0 0
  %671 = vmatpush2.bf16.msra.mxu0 0
  %672 = vmatprep.subr.bf16.mxu0 0
  %673 = vmatpush2.bf16.msra.mxu0 0
  %674 = vmatprep.subr.bf16.mxu0 0
  %675 = vmatpush2.bf16.msra.mxu0 0
  %676 = vmatprep.mubr.bf16.mxu0 0
  %677 = vmatmul.mubr.bf16.gmra.mxu0 %v602
  %v678 = vpop.f32.mrf.mxu0
  %v679 = vadd.f32 0.0, %v678
  %v680 = vpop.f32.mrf.mxu0
  %v681 = vpop.f32.mrf.mxu0
  %v682 = vpop.f32.mrf.mxu0
  %683 = vdwg.mxu0
  %s684 = scalar_lea.vmem [#allocation2], 24
  %v685 = vld [vmem:[%s684] sm:$0xff]
  %v686 = vld [vmem:[%s684 + $0x8] sm:$0xff]
  %v687 = vld [vmem:[%s684 + $0x10] sm:$0xff]
  %v688 = vadd.f32 %v685, %v638
  %v689 = vxor.u32 %v688, 2147483648
  %v690 = vmul.f32 %v689, 1.442695
  %v691 = vpow.pop %v690
  %v692 = vadd.f32 %v691, 1.0
  %v693 = vrcp.pop %v692
  %v694 = vmul.f32 1.0, %v693
  %v695 = vadd.f32 %v686, %v640
  %v696 = vxor.u32 %v695, 2147483648
  %v697 = vmul.f32 %v696, 1.442695
  %v698 = vpow.pop %v697
  %v699 = vadd.f32 %v698, 1.0
  %v700 = vrcp.pop %v699
  %v701 = vmul.f32 1.0, %v700
  %v702 = vadd.f32 %v679, %v592
  %v703 = vmul.f32 %v694, %v702
  %v704 = vadd.f32 %v687, %v703
  %v705 = vtanh.pop %v704
  %v706 = vsub.f32 1.0, %v701
  %v707 = vmul.f32 %v706, %v705
  %v708 = vmul.f32 %v701, %v601
  %v709 = vadd.f32 %v707, %v708
  %v710 = vpack.c.bf16 %v709, %v709
  %711 = vmatprep.subr.bf16.mxu0 %v463
  %712 = vmatpush1.bf16.msra.mxu0 %v462
  %713 = vmatprep.subr.bf16.mxu0 %v460
  %714 = vmatpush1.bf16.msra.mxu0 %v459
  %715 = vmatprep.subr.bf16.mxu0 %v457
  %716 = vmatpush1.bf16.msra.mxu0 %v456
  %717 = vmatprep.subr.bf16.mxu0 %v454
  %718 = vmatpush1.bf16.msra.mxu0 %v453
  %719 = vmatprep.subr.bf16.mxu0 %v451
  %720 = vmatpush1.bf16.msra.mxu0 %v450
  %721 = vmatprep.subr.bf16.mxu0 %v448
  %722 = vmatpush1.bf16.msra.mxu0 %v447
  %723 = vmatprep.subr.bf16.mxu0 %v445
  %724 = vmatpush1.bf16.msra.mxu0 %v444
  %725 = vmatprep.subr.bf16.mxu0 %v442
  %726 = vmatpush1.bf16.msra.mxu0 %v441
  %727 = vmatprep.subr.bf16.mxu0 0
  %728 = vmatpush2.bf16.msra.mxu0 0
  %729 = vmatprep.subr.bf16.mxu0 0
  %730 = vmatpush2.bf16.msra.mxu0 0
  %731 = vmatprep.subr.bf16.mxu0 0
  %732 = vmatpush2.bf16.msra.mxu0 0
  %733 = vmatprep.subr.bf16.mxu0 0
  %734 = vmatpush2.bf16.msra.mxu0 0
  %735 = vmatprep.subr.bf16.mxu0 0
  %736 = vmatpush2.bf16.msra.mxu0 0
  %737 = vmatprep.subr.bf16.mxu0 0
  %738 = vmatpush2.bf16.msra.mxu0 0
  %739 = vmatprep.subr.bf16.mxu0 0
  %740 = vmatpush2.bf16.msra.mxu0 0
  %741 = vmatprep.subr.bf16.mxu0 0
  %742 = vmatpush2.bf16.msra.mxu0 0
  %743 = vmatprep.mubr.bf16.mxu0 0
  %744 = vmatmul.mubr.bf16.gmra.mxu0 %v710
  %v745 = vpop.f32.mrf.mxu0
  %v746 = vadd.f32 0.0, %v745
  %v747 = vpop.f32.mrf.mxu0
  %v748 = vadd.f32 0.0, %v747
  %v749 = vpop.f32.mrf.mxu0
  %v750 = vpop.f32.mrf.mxu0
  %751 = vdwg.mxu0
  %752 = vmatprep.subr.bf16.mxu0 0
  %753 = vmatpush1.bf16.msra.mxu0 %v464
  %754 = vmatprep.subr.bf16.mxu0 0
  %755 = vmatpush1.bf16.msra.mxu0 %v461
  %756 = vmatprep.subr.bf16.mxu0 0
  %757 = vmatpush1.bf16.msra.mxu0 %v458
  %758 = vmatprep.subr.bf16.mxu0 0
  %759 = vmatpush1.bf16.msra.mxu0 %v455
  %760 = vmatprep.subr.bf16.mxu0 0
  %761 = vmatpush1.bf16.msra.mxu0 %v452
  %762 = vmatprep.subr.bf16.mxu0 0
  %763 = vmatpush1.bf16.msra.mxu0 %v449
  %764 = vmatprep.subr.bf16.mxu0 0
  %765 = vmatpush1.bf16.msra.mxu0 %v446
  %766 = vmatprep.subr.bf16.mxu0 0
  %767 = vmatpush1.bf16.msra.mxu0 %v443
  %768 = vmatprep.subr.bf16.mxu0 0
  %769 = vmatpush2.bf16.msra.mxu0 0
  %770 = vmatprep.subr.bf16.mxu0 0
  %771 = vmatpush2.bf16.msra.mxu0 0
  %772 = vmatprep.subr.bf16.mxu0 0
  %773 = vmatpush2.bf16.msra.mxu0 0
  %774 = vmatprep.subr.bf16.mxu0 0
  %775 = vmatpush2.bf16.msra.mxu0 0
  %776 = vmatprep.subr.bf16.mxu0 0
  %777 = vmatpush2.bf16.msra.mxu0 0
  %778 = vmatprep.subr.bf16.mxu0 0
  %779 = vmatpush2.bf16.msra.mxu0 0
  %780 = vmatprep.subr.bf16.mxu0 0
  %781 = vmatpush2.bf16.msra.mxu0 0
  %782 = vmatprep.subr.bf16.mxu0 0
  %783 = vmatpush2.bf16.msra.mxu0 0
  %784 = vmatprep.mubr.bf16.mxu0 0
  %785 = vmatmul.mubr.bf16.gmra.mxu0 %v710
  %v786 = vpop.f32.mrf.mxu0
  %v787 = vadd.f32 0.0, %v786
  %v788 = vpop.f32.mrf.mxu0
  %v789 = vpop.f32.mrf.mxu0
  %v790 = vpop.f32.mrf.mxu0
  %791 = vdwg.mxu0
  %s792 = scalar_lea.vmem [#allocation2], 48
  %v793 = vld [vmem:[%s792] sm:$0xff]
  %v794 = vld [vmem:[%s792 + $0x8] sm:$0xff]
  %v795 = vld [vmem:[%s792 + $0x10] sm:$0xff]
  %v796 = vadd.f32 %v793, %v746
  %v797 = vxor.u32 %v796, 2147483648
  %v798 = vmul.f32 %v797, 1.442695
  %v799 = vpow.pop %v798
  %v800 = vadd.f32 %v799, 1.0
  %v801 = vrcp.pop %v800
  %v802 = vmul.f32 1.0, %v801
  %v803 = vadd.f32 %v794, %v748
  %v804 = vxor.u32 %v803, 2147483648
  %v805 = vmul.f32 %v804, 1.442695
  %v806 = vpow.pop %v805
  %v807 = vadd.f32 %v806, 1.0
  %v808 = vrcp.pop %v807
  %v809 = vmul.f32 1.0, %v808
  %v810 = vadd.f32 %v787, %v592
  %v811 = vmul.f32 %v802, %v810
  %v812 = vadd.f32 %v795, %v811
  %v813 = vtanh.pop %v812
  %v814 = vsub.f32 1.0, %v809
  %v815 = vmul.f32 %v814, %v813
  %v816 = vmul.f32 %v809, %v709
  %v817 = vadd.f32 %v815, %v816
  %v818 = vpack.c.bf16 %v817, %v817
  %819 = vmatprep.subr.bf16.mxu0 %v463
  %820 = vmatpush1.bf16.msra.mxu0 %v462
  %821 = vmatprep.subr.bf16.mxu0 %v460
  %822 = vmatpush1.bf16.msra.mxu0 %v459
  %823 = vmatprep.subr.bf16.mxu0 %v457
  %824 = vmatpush1.bf16.msra.mxu0 %v456
  %825 = vmatprep.subr.bf16.mxu0 %v454
  %826 = vmatpush1.bf16.msra.mxu0 %v453
  %827 = vmatprep.subr.bf16.mxu0 %v451
  %828 = vmatpush1.bf16.msra.mxu0 %v450
  %829 = vmatprep.subr.bf16.mxu0 %v448
  %830 = vmatpush1.bf16.msra.mxu0 %v447
  %831 = vmatprep.subr.bf16.mxu0 %v445
  %832 = vmatpush1.bf16.msra.mxu0 %v444
  %833 = vmatprep.subr.bf16.mxu0 %v442
  %834 = vmatpush1.bf16.msra.mxu0 %v441
  %835 = vmatprep.subr.bf16.mxu0 0
  %836 = vmatpush2.bf16.msra.mxu0 0
  %837 = vmatprep.subr.bf16.mxu0 0
  %838 = vmatpush2.bf16.msra.mxu0 0
  %839 = vmatprep.subr.bf16.mxu0 0
  %840 = vmatpush2.bf16.msra.mxu0 0
  %841 = vmatprep.subr.bf16.mxu0 0
  %842 = vmatpush2.bf16.msra.mxu0 0
  %843 = vmatprep.subr.bf16.mxu0 0
  %844 = vmatpush2.bf16.msra.mxu0 0
  %845 = vmatprep.subr.bf16.mxu0 0
  %846 = vmatpush2.bf16.msra.mxu0 0
  %847 = vmatprep.subr.bf16.mxu0 0
  %848 = vmatpush2.bf16.msra.mxu0 0
  %849 = vmatprep.subr.bf16.mxu0 0
  %850 = vmatpush2.bf16.msra.mxu0 0
  %851 = vmatprep.mubr.bf16.mxu0 0
  %852 = vmatmul.mubr.bf16.gmra.mxu0 %v818
  %v853 = vpop.f32.mrf.mxu0
  %v854 = vadd.f32 0.0, %v853
  %v855 = vpop.f32.mrf.mxu0
  %v856 = vadd.f32 0.0, %v855
  %v857 = vpop.f32.mrf.mxu0
  %v858 = vpop.f32.mrf.mxu0
  %859 = vdwg.mxu0
  %860 = vmatprep.subr.bf16.mxu0 0
  %861 = vmatpush1.bf16.msra.mxu0 %v464
  %862 = vmatprep.subr.bf16.mxu0 0
  %863 = vmatpush1.bf16.msra.mxu0 %v461
  %864 = vmatprep.subr.bf16.mxu0 0
  %865 = vmatpush1.bf16.msra.mxu0 %v458
  %866 = vmatprep.subr.bf16.mxu0 0
  %867 = vmatpush1.bf16.msra.mxu0 %v455
  %868 = vmatprep.subr.bf16.mxu0 0
  %869 = vmatpush1.bf16.msra.mxu0 %v452
  %870 = vmatprep.subr.bf16.mxu0 0
  %871 = vmatpush1.bf16.msra.mxu0 %v449
  %872 = vmatprep.subr.bf16.mxu0 0
  %873 = vmatpush1.bf16.msra.mxu0 %v446
  %874 = vmatprep.subr.bf16.mxu0 0
  %875 = vmatpush1.bf16.msra.mxu0 %v443
  %876 = vmatprep.subr.bf16.mxu0 0
  %877 = vmatpush2.bf16.msra.mxu0 0
  %878 = vmatprep.subr.bf16.mxu0 0
  %879 = vmatpush2.bf16.msra.mxu0 0
  %880 = vmatprep.subr.bf16.mxu0 0
  %881 = vmatpush2.bf16.msra.mxu0 0
  %882 = vmatprep.subr.bf16.mxu0 0
  %883 = vmatpush2.bf16.msra.mxu0 0
  %884 = vmatprep.subr.bf16.mxu0 0
  %885 = vmatpush2.bf16.msra.mxu0 0
  %886 = vmatprep.subr.bf16.mxu0 0
  %887 = vmatpush2.bf16.msra.mxu0 0
  %888 = vmatprep.subr.bf16.mxu0 0
  %889 = vmatpush2.bf16.msra.mxu0 0
  %890 = vmatprep.subr.bf16.mxu0 0
  %891 = vmatpush2.bf16.msra.mxu0 0
  %892 = vmatprep.mubr.bf16.mxu0 0
  %893 = vmatmul.mubr.bf16.gmra.mxu0 %v818
  %v894 = vpop.f32.mrf.mxu0
  %v895 = vadd.f32 0.0, %v894
  %v896 = vpop.f32.mrf.mxu0
  %v897 = vpop.f32.mrf.mxu0
  %v898 = vpop.f32.mrf.mxu0
  %899 = vdwg.mxu0
  %s900 = scalar_lea.vmem [#allocation2], 72
  %v901 = vld [vmem:[%s900] sm:$0xff]
  %v902 = vld [vmem:[%s900 + $0x8] sm:$0xff]
  %v903 = vld [vmem:[%s900 + $0x10] sm:$0xff]
  %v904 = vadd.f32 %v901, %v854
  %v905 = vxor.u32 %v904, 2147483648
  %v906 = vmul.f32 %v905, 1.442695
  %v907 = vpow.pop %v906
  %v908 = vadd.f32 %v907, 1.0
  %v909 = vrcp.pop %v908
  %v910 = vmul.f32 1.0, %v909
  %v911 = vadd.f32 %v902, %v856
  %v912 = vxor.u32 %v911, 2147483648
  %v913 = vmul.f32 %v912, 1.442695
  %v914 = vpow.pop %v913
  %v915 = vadd.f32 %v914, 1.0
  %v916 = vrcp.pop %v915
  %v917 = vmul.f32 1.0, %v916
  %v918 = vadd.f32 %v895, %v592
  %v919 = vmul.f32 %v910, %v918
  %v920 = vadd.f32 %v903, %v919
  %v921 = vtanh.pop %v920
  %v922 = vsub.f32 1.0, %v917
  %v923 = vmul.f32 %v922, %v921
  %v924 = vmul.f32 %v917, %v817
  %v925 = vadd.f32 %v923, %v924
  %v926 = vpack.c.bf16 %v925, %v925
  %927 = vmatprep.subr.bf16.mxu0 %v463
  %928 = vmatpush1.bf16.msra.mxu0 %v462
  %929 = vmatprep.subr.bf16.mxu0 %v460
  %930 = vmatpush1.bf16.msra.mxu0 %v459
  %931 = vmatprep.subr.bf16.mxu0 %v457
  %932 = vmatpush1.bf16.msra.mxu0 %v456
  %933 = vmatprep.subr.bf16.mxu0 %v454
  %934 = vmatpush1.bf16.msra.mxu0 %v453
  %935 = vmatprep.subr.bf16.mxu0 %v451
  %936 = vmatpush1.bf16.msra.mxu0 %v450
  %937 = vmatprep.subr.bf16.mxu0 %v448
  %938 = vmatpush1.bf16.msra.mxu0 %v447
  %939 = vmatprep.subr.bf16.mxu0 %v445
  %940 = vmatpush1.bf16.msra.mxu0 %v444
  %941 = vmatprep.subr.bf16.mxu0 %v442
  %942 = vmatpush1.bf16.msra.mxu0 %v441
  %943 = vmatprep.subr.bf16.mxu0 0
  %944 = vmatpush2.bf16.msra.mxu0 0
  %945 = vmatprep.subr.bf16.mxu0 0
  %946 = vmatpush2.bf16.msra.mxu0 0
  %947 = vmatprep.subr.bf16.mxu0 0
  %948 = vmatpush2.bf16.msra.mxu0 0
  %949 = vmatprep.subr.bf16.mxu0 0
  %950 = vmatpush2.bf16.msra.mxu0 0
  %951 = vmatprep.subr.bf16.mxu0 0
  %952 = vmatpush2.bf16.msra.mxu0 0
  %953 = vmatprep.subr.bf16.mxu0 0
  %954 = vmatpush2.bf16.msra.mxu0 0
  %955 = vmatprep.subr.bf16.mxu0 0
  %956 = vmatpush2.bf16.msra.mxu0 0
  %957 = vmatprep.subr.bf16.mxu0 0
  %958 = vmatpush2.bf16.msra.mxu0 0
  %959 = vmatprep.mubr.bf16.mxu0 0
  %960 = vmatmul.mubr.bf16.gmra.mxu0 %v926
  %v961 = vpop.f32.mrf.mxu0
  %v962 = vadd.f32 0.0, %v961
  %v963 = vpop.f32.mrf.mxu0
  %v964 = vadd.f32 0.0, %v963
  %v965 = vpop.f32.mrf.mxu0
  %v966 = vpop.f32.mrf.mxu0
  %967 = vdwg.mxu0
  %968 = vmatprep.subr.bf16.mxu0 0
  %969 = vmatpush1.bf16.msra.mxu0 %v464
  %970 = vmatprep.subr.bf16.mxu0 0
  %971 = vmatpush1.bf16.msra.mxu0 %v461
  %972 = vmatprep.subr.bf16.mxu0 0
  %973 = vmatpush1.bf16.msra.mxu0 %v458
  %974 = vmatprep.subr.bf16.mxu0 0
  %975 = vmatpush1.bf16.msra.mxu0 %v455
  %976 = vmatprep.subr.bf16.mxu0 0
  %977 = vmatpush1.bf16.msra.mxu0 %v452
  %978 = vmatprep.subr.bf16.mxu0 0
  %979 = vmatpush1.bf16.msra.mxu0 %v449
  %980 = vmatprep.subr.bf16.mxu0 0
  %981 = vmatpush1.bf16.msra.mxu0 %v446
  %982 = vmatprep.subr.bf16.mxu0 0
  %983 = vmatpush1.bf16.msra.mxu0 %v443
  %984 = vmatprep.subr.bf16.mxu0 0
  %985 = vmatpush2.bf16.msra.mxu0 0
  %986 = vmatprep.subr.bf16.mxu0 0
  %987 = vmatpush2.bf16.msra.mxu0 0
  %988 = vmatprep.subr.bf16.mxu0 0
  %989 = vmatpush2.bf16.msra.mxu0 0
  %990 = vmatprep.subr.bf16.mxu0 0
  %991 = vmatpush2.bf16.msra.mxu0 0
  %992 = vmatprep.subr.bf16.mxu0 0
  %993 = vmatpush2.bf16.msra.mxu0 0
  %994 = vmatprep.subr.bf16.mxu0 0
  %995 = vmatpush2.bf16.msra.mxu0 0
  %996 = vmatprep.subr.bf16.mxu0 0
  %997 = vmatpush2.bf16.msra.mxu0 0
  %998 = vmatprep.subr.bf16.mxu0 0
  %999 = vmatpush2.bf16.msra.mxu0 0
  %1000 = vmatprep.mubr.bf16.mxu0 0
  %1001 = vmatmul.mubr.bf16.gmra.mxu0 %v926
  %v1002 = vpop.f32.mrf.mxu0
  %v1003 = vadd.f32 0.0, %v1002
  %v1004 = vpop.f32.mrf.mxu0
  %v1005 = vpop.f32.mrf.mxu0
  %v1006 = vpop.f32.mrf.mxu0
  %1007 = vdwg.mxu0
  %s1008 = scalar_lea.vmem [#allocation2], 96
  %v1009 = vld [vmem:[%s1008] sm:$0xff]
  %v1010 = vld [vmem:[%s1008 + $0x8] sm:$0xff]
  %v1011 = vld [vmem:[%s1008 + $0x10] sm:$0xff]
  %v1012 = vadd.f32 %v1009, %v962
  %v1013 = vxor.u32 %v1012, 2147483648
  %v1014 = vmul.f32 %v1013, 1.442695
  %v1015 = vpow.pop %v1014
  %v1016 = vadd.f32 %v1015, 1.0
  %v1017 = vrcp.pop %v1016
  %v1018 = vmul.f32 1.0, %v1017
  %v1019 = vadd.f32 %v1010, %v964
  %v1020 = vxor.u32 %v1019, 2147483648
  %v1021 = vmul.f32 %v1020, 1.442695
  %v1022 = vpow.pop %v1021
  %v1023 = vadd.f32 %v1022, 1.0
  %v1024 = vrcp.pop %v1023
  %v1025 = vmul.f32 1.0, %v1024
  %v1026 = vadd.f32 %v1003, %v592
  %v1027 = vmul.f32 %v1018, %v1026
  %v1028 = vadd.f32 %v1011, %v1027
  %v1029 = vtanh.pop %v1028
  %v1030 = vsub.f32 1.0, %v1025
  %v1031 = vmul.f32 %v1030, %v1029
  %v1032 = vmul.f32 %v1025, %v925
  %v1033 = vadd.f32 %v1031, %v1032
  %v1034 = vpack.c.bf16 %v1033, %v1033
  %1035 = vmatprep.subr.bf16.mxu0 %v463
  %1036 = vmatpush1.bf16.msra.mxu0 %v462
  %1037 = vmatprep.subr.bf16.mxu0 %v460
  %1038 = vmatpush1.bf16.msra.mxu0 %v459
  %1039 = vmatprep.subr.bf16.mxu0 %v457
  %1040 = vmatpush1.bf16.msra.mxu0 %v456
  %1041 = vmatprep.subr.bf16.mxu0 %v454
  %1042 = vmatpush1.bf16.msra.mxu0 %v453
  %1043 = vmatprep.subr.bf16.mxu0 %v451
  %1044 = vmatpush1.bf16.msra.mxu0 %v450
  %1045 = vmatprep.subr.bf16.mxu0 %v448
  %1046 = vmatpush1.bf16.msra.mxu0 %v447
  %1047 = vmatprep.subr.bf16.mxu0 %v445
  %1048 = vmatpush1.bf16.msra.mxu0 %v444
  %1049 = vmatprep.subr.bf16.mxu0 %v442
  %1050 = vmatpush1.bf16.msra.mxu0 %v441
  %1051 = vmatprep.subr.bf16.mxu0 0
  %1052 = vmatpush2.bf16.msra.mxu0 0
  %1053 = vmatprep.subr.bf16.mxu0 0
  %1054 = vmatpush2.bf16.msra.mxu0 0
  %1055 = vmatprep.subr.bf16.mxu0 0
  %1056 = vmatpush2.bf16.msra.mxu0 0
  %1057 = vmatprep.subr.bf16.mxu0 0
  %1058 = vmatpush2.bf16.msra.mxu0 0
  %1059 = vmatprep.subr.bf16.mxu0 0
  %1060 = vmatpush2.bf16.msra.mxu0 0
  %1061 = vmatprep.subr.bf16.mxu0 0
  %1062 = vmatpush2.bf16.msra.mxu0 0
  %1063 = vmatprep.subr.bf16.mxu0 0
  %1064 = vmatpush2.bf16.msra.mxu0 0
  %1065 = vmatprep.subr.bf16.mxu0 0
  %1066 = vmatpush2.bf16.msra.mxu0 0
  %1067 = vmatprep.mubr.bf16.mxu0 0
  %1068 = vmatmul.mubr.bf16.gmra.mxu0 %v1034
  %v1069 = vpop.f32.mrf.mxu0
  %v1070 = vadd.f32 0.0, %v1069
  %v1071 = vpop.f32.mrf.mxu0
  %v1072 = vadd.f32 0.0, %v1071
  %v1073 = vpop.f32.mrf.mxu0
  %v1074 = vpop.f32.mrf.mxu0
  %1075 = vdwg.mxu0
  %1076 = vmatprep.subr.bf16.mxu0 0
  %1077 = vmatpush1.bf16.msra.mxu0 %v464
  %1078 = vmatprep.subr.bf16.mxu0 0
  %1079 = vmatpush1.bf16.msra.mxu0 %v461
  %1080 = vmatprep.subr.bf16.mxu0 0
  %1081 = vmatpush1.bf16.msra.mxu0 %v458
  %1082 = vmatprep.subr.bf16.mxu0 0
  %1083 = vmatpush1.bf16.msra.mxu0 %v455
  %1084 = vmatprep.subr.bf16.mxu0 0
  %1085 = vmatpush1.bf16.msra.mxu0 %v452
  %1086 = vmatprep.subr.bf16.mxu0 0
  %1087 = vmatpush1.bf16.msra.mxu0 %v449
  %1088 = vmatprep.subr.bf16.mxu0 0
  %1089 = vmatpush1.bf16.msra.mxu0 %v446
  %1090 = vmatprep.subr.bf16.mxu0 0
  %1091 = vmatpush1.bf16.msra.mxu0 %v443
  %1092 = vmatprep.subr.bf16.mxu0 0
  %1093 = vmatpush2.bf16.msra.mxu0 0
  %1094 = vmatprep.subr.bf16.mxu0 0
  %1095 = vmatpush2.bf16.msra.mxu0 0
  %1096 = vmatprep.subr.bf16.mxu0 0
  %1097 = vmatpush2.bf16.msra.mxu0 0
  %1098 = vmatprep.subr.bf16.mxu0 0
  %1099 = vmatpush2.bf16.msra.mxu0 0
  %1100 = vmatprep.subr.bf16.mxu0 0
  %1101 = vmatpush2.bf16.msra.mxu0 0
  %1102 = vmatprep.subr.bf16.mxu0 0
  %1103 = vmatpush2.bf16.msra.mxu0 0
  %1104 = vmatprep.subr.bf16.mxu0 0
  %1105 = vmatpush2.bf16.msra.mxu0 0
  %1106 = vmatprep.subr.bf16.mxu0 0
  %1107 = vmatpush2.bf16.msra.mxu0 0
  %1108 = vmatprep.mubr.bf16.mxu0 0
  %1109 = vmatmul.mubr.bf16.gmra.mxu0 %v1034
  %v1110 = vpop.f32.mrf.mxu0
  %v1111 = vadd.f32 0.0, %v1110
  %v1112 = vpop.f32.mrf.mxu0
  %v1113 = vpop.f32.mrf.mxu0
  %v1114 = vpop.f32.mrf.mxu0
  %1115 = vdwg.mxu0
  %s1116 = scalar_lea.vmem [#allocation2], 120
  %v1117 = vld [vmem:[%s1116] sm:$0xff]
  %v1118 = vld [vmem:[%s1116 + $0x8] sm:$0xff]
  %v1119 = vld [vmem:[%s1116 + $0x10] sm:$0xff]
  %v1120 = vadd.f32 %v1117, %v1070
  %v1121 = vxor.u32 %v1120, 2147483648
  %v1122 = vmul.f32 %v1121, 1.442695
  %v1123 = vpow.pop %v1122
  %v1124 = vadd.f32 %v1123, 1.0
  %v1125 = vrcp.pop %v1124
  %v1126 = vmul.f32 1.0, %v1125
  %v1127 = vadd.f32 %v1118, %v1072
  %v1128 = vxor.u32 %v1127, 2147483648
  %v1129 = vmul.f32 %v1128, 1.442695
  %v1130 = vpow.pop %v1129
  %v1131 = vadd.f32 %v1130, 1.0
  %v1132 = vrcp.pop %v1131
  %v1133 = vmul.f32 1.0, %v1132
  %v1134 = vadd.f32 %v1111, %v592
  %v1135 = vmul.f32 %v1126, %v1134
  %v1136 = vadd.f32 %v1119, %v1135
  %v1137 = vtanh.pop %v1136
  %v1138 = vsub.f32 1.0, %v1133
  %v1139 = vmul.f32 %v1138, %v1137
  %v1140 = vmul.f32 %v1133, %v1033
  %v1141 = vadd.f32 %v1139, %v1140
  %v1142 = vpack.c.bf16 %v1141, %v1141
  %1143 = vmatprep.subr.bf16.mxu0 %v463
  %1144 = vmatpush1.bf16.msra.mxu0 %v462
  %1145 = vmatprep.subr.bf16.mxu0 %v460
  %1146 = vmatpush1.bf16.msra.mxu0 %v459
  %1147 = vmatprep.subr.bf16.mxu0 %v457
  %1148 = vmatpush1.bf16.msra.mxu0 %v456
  %1149 = vmatprep.subr.bf16.mxu0 %v454
  %1150 = vmatpush1.bf16.msra.mxu0 %v453
  %1151 = vmatprep.subr.bf16.mxu0 %v451
  %1152 = vmatpush1.bf16.msra.mxu0 %v450
  %1153 = vmatprep.subr.bf16.mxu0 %v448
  %1154 = vmatpush1.bf16.msra.mxu0 %v447
  %1155 = vmatprep.subr.bf16.mxu0 %v445
  %1156 = vmatpush1.bf16.msra.mxu0 %v444
  %1157 = vmatprep.subr.bf16.mxu0 %v442
  %1158 = vmatpush1.bf16.msra.mxu0 %v441
  %1159 = vmatprep.subr.bf16.mxu0 0
  %1160 = vmatpush2.bf16.msra.mxu0 0
  %1161 = vmatprep.subr.bf16.mxu0 0
  %1162 = vmatpush2.bf16.msra.mxu0 0
  %1163 = vmatprep.subr.bf16.mxu0 0
  %1164 = vmatpush2.bf16.msra.mxu0 0
  %1165 = vmatprep.subr.bf16.mxu0 0
  %1166 = vmatpush2.bf16.msra.mxu0 0
  %1167 = vmatprep.subr.bf16.mxu0 0
  %1168 = vmatpush2.bf16.msra.mxu0 0
  %1169 = vmatprep.subr.bf16.mxu0 0
  %1170 = vmatpush2.bf16.msra.mxu0 0
  %1171 = vmatprep.subr.bf16.mxu0 0
  %1172 = vmatpush2.bf16.msra.mxu0 0
  %1173 = vmatprep.subr.bf16.mxu0 0
  %1174 = vmatpush2.bf16.msra.mxu0 0
  %1175 = vmatprep.mubr.bf16.mxu0 0
  %1176 = vmatmul.mubr.bf16.gmra.mxu0 %v1142
  %v1177 = vpop.f32.mrf.mxu0
  %v1178 = vadd.f32 0.0, %v1177
  %v1179 = vpop.f32.mrf.mxu0
  %v1180 = vadd.f32 0.0, %v1179
  %v1181 = vpop.f32.mrf.mxu0
  %v1182 = vpop.f32.mrf.mxu0
  %1183 = vdwg.mxu0
  %1184 = vmatprep.subr.bf16.mxu0 0
  %1185 = vmatpush1.bf16.msra.mxu0 %v464
  %1186 = vmatprep.subr.bf16.mxu0 0
  %1187 = vmatpush1.bf16.msra.mxu0 %v461
  %1188 = vmatprep.subr.bf16.mxu0 0
  %1189 = vmatpush1.bf16.msra.mxu0 %v458
  %1190 = vmatprep.subr.bf16.mxu0 0
  %1191 = vmatpush1.bf16.msra.mxu0 %v455
  %1192 = vmatprep.subr.bf16.mxu0 0
  %1193 = vmatpush1.bf16.msra.mxu0 %v452
  %1194 = vmatprep.subr.bf16.mxu0 0
  %1195 = vmatpush1.bf16.msra.mxu0 %v449
  %1196 = vmatprep.subr.bf16.mxu0 0
  %1197 = vmatpush1.bf16.msra.mxu0 %v446
  %1198 = vmatprep.subr.bf16.mxu0 0
  %1199 = vmatpush1.bf16.msra.mxu0 %v443
  %1200 = vmatprep.subr.bf16.mxu0 0
  %1201 = vmatpush2.bf16.msra.mxu0 0
  %1202 = vmatprep.subr.bf16.mxu0 0
  %1203 = vmatpush2.bf16.msra.mxu0 0
  %1204 = vmatprep.subr.bf16.mxu0 0
  %1205 = vmatpush2.bf16.msra.mxu0 0
  %1206 = vmatprep.subr.bf16.mxu0 0
  %1207 = vmatpush2.bf16.msra.mxu0 0
  %1208 = vmatprep.subr.bf16.mxu0 0
  %1209 = vmatpush2.bf16.msra.mxu0 0
  %1210 = vmatprep.subr.bf16.mxu0 0
  %1211 = vmatpush2.bf16.msra.mxu0 0
  %1212 = vmatprep.subr.bf16.mxu0 0
  %1213 = vmatpush2.bf16.msra.mxu0 0
  %1214 = vmatprep.subr.bf16.mxu0 0
  %1215 = vmatpush2.bf16.msra.mxu0 0
  %1216 = vmatprep.mubr.bf16.mxu0 0
  %1217 = vmatmul.mubr.bf16.gmra.mxu0 %v1142
  %v1218 = vpop.f32.mrf.mxu0
  %v1219 = vadd.f32 0.0, %v1218
  %v1220 = vpop.f32.mrf.mxu0
  %v1221 = vpop.f32.mrf.mxu0
  %v1222 = vpop.f32.mrf.mxu0
  %1223 = vdwg.mxu0
  %s1224 = scalar_lea.vmem [#allocation2], 144
  %v1225 = vld [vmem:[%s1224] sm:$0xff]
  %v1226 = vld [vmem:[%s1224 + $0x8] sm:$0xff]
  %v1227 = vld [vmem:[%s1224 + $0x10] sm:$0xff]
  %v1228 = vadd.f32 %v1225, %v1178
  %v1229 = vxor.u32 %v1228, 2147483648
  %v1230 = vmul.f32 %v1229, 1.442695
  %v1231 = vpow.pop %v1230
  %v1232 = vadd.f32 %v1231, 1.0
  %v1233 = vrcp.pop %v1232
  %v1234 = vmul.f32 1.0, %v1233
  %v1235 = vadd.f32 %v1226, %v1180
  %v1236 = vxor.u32 %v1235, 2147483648
  %v1237 = vmul.f32 %v1236, 1.442695
  %v1238 = vpow.pop %v1237
  %v1239 = vadd.f32 %v1238, 1.0
  %v1240 = vrcp.pop %v1239
  %v1241 = vmul.f32 1.0, %v1240
  %v1242 = vadd.f32 %v1219, %v592
  %v1243 = vmul.f32 %v1234, %v1242
  %v1244 = vadd.f32 %v1227, %v1243
  %v1245 = vtanh.pop %v1244
  %v1246 = vsub.f32 1.0, %v1241
  %v1247 = vmul.f32 %v1246, %v1245
  %v1248 = vmul.f32 %v1241, %v1141
  %v1249 = vadd.f32 %v1247, %v1248
  %v1250 = vpack.c.bf16 %v1249, %v1249
  %1251 = vmatprep.subr.bf16.mxu0 %v463
  %1252 = vmatpush1.bf16.msra.mxu0 %v462
  %1253 = vmatprep.subr.bf16.mxu0 %v460
  %1254 = vmatpush1.bf16.msra.mxu0 %v459
  %1255 = vmatprep.subr.bf16.mxu0 %v457
  %1256 = vmatpush1.bf16.msra.mxu0 %v456
  %1257 = vmatprep.subr.bf16.mxu0 %v454
  %1258 = vmatpush1.bf16.msra.mxu0 %v453
  %1259 = vmatprep.subr.bf16.mxu0 %v451
  %1260 = vmatpush1.bf16.msra.mxu0 %v450
  %1261 = vmatprep.subr.bf16.mxu0 %v448
  %1262 = vmatpush1.bf16.msra.mxu0 %v447
  %1263 = vmatprep.subr.bf16.mxu0 %v445
  %1264 = vmatpush1.bf16.msra.mxu0 %v444
  %1265 = vmatprep.subr.bf16.mxu0 %v442
  %1266 = vmatpush1.bf16.msra.mxu0 %v441
  %1267 = vmatprep.subr.bf16.mxu0 0
  %1268 = vmatpush2.bf16.msra.mxu0 0
  %1269 = vmatprep.subr.bf16.mxu0 0
  %1270 = vmatpush2.bf16.msra.mxu0 0
  %1271 = vmatprep.subr.bf16.mxu0 0
  %1272 = vmatpush2.bf16.msra.mxu0 0
  %1273 = vmatprep.subr.bf16.mxu0 0
  %1274 = vmatpush2.bf16.msra.mxu0 0
  %1275 = vmatprep.subr.bf16.mxu0 0
  %1276 = vmatpush2.bf16.msra.mxu0 0
  %1277 = vmatprep.subr.bf16.mxu0 0
  %1278 = vmatpush2.bf16.msra.mxu0 0
  %1279 = vmatprep.subr.bf16.mxu0 0
  %1280 = vmatpush2.bf16.msra.mxu0 0
  %1281 = vmatprep.subr.bf16.mxu0 0
  %1282 = vmatpush2.bf16.msra.mxu0 0
  %1283 = vmatprep.mubr.bf16.mxu0 0
  %1284 = vmatmul.mubr.bf16.gmra.mxu0 %v1250
  %v1285 = vpop.f32.mrf.mxu0
  %v1286 = vadd.f32 0.0, %v1285
  %v1287 = vpop.f32.mrf.mxu0
  %v1288 = vadd.f32 0.0, %v1287
  %v1289 = vpop.f32.mrf.mxu0
  %v1290 = vpop.f32.mrf.mxu0
  %1291 = vdwg.mxu0
  %1292 = vmatprep.subr.bf16.mxu0 0
  %1293 = vmatpush1.bf16.msra.mxu0 %v464
  %1294 = vmatprep.subr.bf16.mxu0 0
  %1295 = vmatpush1.bf16.msra.mxu0 %v461
  %1296 = vmatprep.subr.bf16.mxu0 0
  %1297 = vmatpush1.bf16.msra.mxu0 %v458
  %1298 = vmatprep.subr.bf16.mxu0 0
  %1299 = vmatpush1.bf16.msra.mxu0 %v455
  %1300 = vmatprep.subr.bf16.mxu0 0
  %1301 = vmatpush1.bf16.msra.mxu0 %v452
  %1302 = vmatprep.subr.bf16.mxu0 0
  %1303 = vmatpush1.bf16.msra.mxu0 %v449
  %1304 = vmatprep.subr.bf16.mxu0 0
  %1305 = vmatpush1.bf16.msra.mxu0 %v446
  %1306 = vmatprep.subr.bf16.mxu0 0
  %1307 = vmatpush1.bf16.msra.mxu0 %v443
  %1308 = vmatprep.subr.bf16.mxu0 0
  %1309 = vmatpush2.bf16.msra.mxu0 0
  %1310 = vmatprep.subr.bf16.mxu0 0
  %1311 = vmatpush2.bf16.msra.mxu0 0
  %1312 = vmatprep.subr.bf16.mxu0 0
  %1313 = vmatpush2.bf16.msra.mxu0 0
  %1314 = vmatprep.subr.bf16.mxu0 0
  %1315 = vmatpush2.bf16.msra.mxu0 0
  %1316 = vmatprep.subr.bf16.mxu0 0
  %1317 = vmatpush2.bf16.msra.mxu0 0
  %1318 = vmatprep.subr.bf16.mxu0 0
  %1319 = vmatpush2.bf16.msra.mxu0 0
  %1320 = vmatprep.subr.bf16.mxu0 0
  %1321 = vmatpush2.bf16.msra.mxu0 0
  %1322 = vmatprep.subr.bf16.mxu0 0
  %1323 = vmatpush2.bf16.msra.mxu0 0
  %1324 = vmatprep.mubr.bf16.mxu0 0
  %1325 = vmatmul.mubr.bf16.gmra.mxu0 %v1250
  %v1326 = vpop.f32.mrf.mxu0
  %v1327 = vadd.f32 0.0, %v1326
  %v1328 = vpop.f32.mrf.mxu0
  %v1329 = vpop.f32.mrf.mxu0
  %v1330 = vpop.f32.mrf.mxu0
  %1331 = vdwg.mxu0
  %s1332 = scalar_lea.vmem [#allocation2], 168
  %v1333 = vld [vmem:[%s1332] sm:$0xff]
  %v1334 = vld [vmem:[%s1332 + $0x8] sm:$0xff]
  %v1335 = vld [vmem:[%s1332 + $0x10] sm:$0xff]
  %v1336 = vadd.f32 %v1333, %v1286
  %v1337 = vxor.u32 %v1336, 2147483648
  %v1338 = vmul.f32 %v1337, 1.442695
  %v1339 = vpow.pop %v1338
  %v1340 = vadd.f32 %v1339, 1.0
  %v1341 = vrcp.pop %v1340
  %v1342 = vmul.f32 1.0, %v1341
  %v1343 = vadd.f32 %v1334, %v1288
  %v1344 = vxor.u32 %v1343, 2147483648
  %v1345 = vmul.f32 %v1344, 1.442695
  %v1346 = vpow.pop %v1345
  %v1347 = vadd.f32 %v1346, 1.0
  %v1348 = vrcp.pop %v1347
  %v1349 = vmul.f32 1.0, %v1348
  %v1350 = vadd.f32 %v1327, %v592
  %v1351 = vmul.f32 %v1342, %v1350
  %v1352 = vadd.f32 %v1335, %v1351
  %v1353 = vtanh.pop %v1352
  %v1354 = vsub.f32 1.0, %v1349
  %v1355 = vmul.f32 %v1354, %v1353
  %v1356 = vmul.f32 %v1349, %v1249
  %v1357 = vadd.f32 %v1355, %v1356
  %1358 = vst [vmem:[#allocation3] sm:$0xff] %v1357
  // Predicated region
  $region34: #{gru_model_forward.1} parent=0 // pred_check
    %p1359 = pneg %p27
  $region35: #{gru_model_forward.1} parent=0 // pred_check_branch
    %1361 = sbr.rel (%p1359) target = $region37
  $region36: #{gru_model_forward.1} parent=0 // pred_region
    %v1362 = vld [vmem:[%s5] sm:$0xff]
    %v1363 = vld [vmem:[%s5 + $0x8] sm:$0xff]
    %v1364 = vld [vmem:[%s5 + $0x10] sm:$0xff]
    %v1365 = vld [vmem:[%s5 + $0x18] sm:$0xff]
    %v1366 = vld [vmem:[%s5 + $0x20] sm:$0xff]
    %v1367 = vld [vmem:[%s5 + $0x28] sm:$0xff]
    %v1368 = vld [vmem:[%s5 + $0x30] sm:$0xff]
    %v1369 = vld [vmem:[%s5 + $0x38] sm:$0xff]
    %v1370 = vld [vmem:[%s5 + $0x40] sm:$0xff]
    %v1371 = vld [vmem:[%s5 + $0x48] sm:$0xff]
    %v1372 = vld [vmem:[%s5 + $0x50] sm:$0xff]
    %v1373 = vld [vmem:[%s5 + $0x58] sm:$0xff]
    %v1374 = vld [vmem:[%s5 + $0x60] sm:$0xff]
    %v1375 = vld [vmem:[%s5 + $0x68] sm:$0xff]
    %v1376 = vld [vmem:[%s5 + $0x70] sm:$0xff]
    %v1377 = vld [vmem:[%s5 + $0x78] sm:$0xff]
    %v1378 = vld [vmem:[%s6] sm:$0x1]
    %v1380 = vlaneseq
    %v1381 = vshrl.u32 %v1380, 7
    %v1382 = vsub.s32 0, %v1381
    %v1383 = vrot.slane %v1378, %v1382
    %1385 = vmatprep.subr.mxu0 0.0
    %1386 = vmatpush1.msra.mxu0 %v1377
    %1387 = vmatprep.subr.mxu0 0.0
    %1388 = vmatpush1.msra.mxu0 %v1376
    %1389 = vmatprep.subr.mxu0 0.0
    %1390 = vmatpush1.msra.mxu0 %v1375
    %1391 = vmatprep.subr.mxu0 0.0
    %1392 = vmatpush1.msra.mxu0 %v1374
    %1393 = vmatprep.subr.mxu0 0.0
    %1394 = vmatpush1.msra.mxu0 %v1373
    %1395 = vmatprep.subr.mxu0 0.0
    %1396 = vmatpush1.msra.mxu0 %v1372
    %1397 = vmatprep.subr.mxu0 0.0
    %1398 = vmatpush1.msra.mxu0 %v1371
    %1399 = vmatprep.subr.mxu0 0.0
    %1400 = vmatpush1.msra.mxu0 %v1370
    %1401 = vmatprep.subr.mxu0 0.0
    %1402 = vmatpush1.msra.mxu0 %v1369
    %1403 = vmatprep.subr.mxu0 0.0
    %1404 = vmatpush1.msra.mxu0 %v1368
    %1405 = vmatprep.subr.mxu0 0.0
    %1406 = vmatpush1.msra.mxu0 %v1367
    %1407 = vmatprep.subr.mxu0 0.0
    %1408 = vmatpush1.msra.mxu0 %v1366
    %1409 = vmatprep.subr.mxu0 0.0
    %1410 = vmatpush1.msra.mxu0 %v1365
    %1411 = vmatprep.subr.mxu0 0.0
    %1412 = vmatpush1.msra.mxu0 %v1364
    %1413 = vmatprep.subr.mxu0 0.0
    %1414 = vmatpush1.msra.mxu0 %v1363
    %1415 = vmatprep.subr.mxu0 0.0
    %1416 = vmatpush1.msra.mxu0 %v1362
    %1417 = vmatprep.subr.mxu0 0.0
    %1418 = vmatpush2.msra.mxu0 0.0
    %1419 = vmatprep.subr.mxu0 0.0
    %1420 = vmatpush2.msra.mxu0 0.0
    %1421 = vmatprep.subr.mxu0 0.0
    %1422 = vmatpush2.msra.mxu0 0.0
    %1423 = vmatprep.subr.mxu0 0.0
    %1424 = vmatpush2.msra.mxu0 0.0
    %1425 = vmatprep.subr.mxu0 0.0
    %1426 = vmatpush2.msra.mxu0 0.0
    %1427 = vmatprep.subr.mxu0 0.0
    %1428 = vmatpush2.msra.mxu0 0.0
    %1429 = vmatprep.subr.mxu0 0.0
    %1430 = vmatpush2.msra.mxu0 0.0
    %1431 = vmatprep.subr.mxu0 0.0
    %1432 = vmatpush2.msra.mxu0 0.0
    %1433 = vmatprep.subr.mxu0 0.0
    %1434 = vmatpush2.msra.mxu0 0.0
    %1435 = vmatprep.subr.mxu0 0.0
    %1436 = vmatpush2.msra.mxu0 0.0
    %1437 = vmatprep.subr.mxu0 0.0
    %1438 = vmatpush2.msra.mxu0 0.0
    %1439 = vmatprep.subr.mxu0 0.0
    %1440 = vmatpush2.msra.mxu0 0.0
    %1441 = vmatprep.subr.mxu0 0.0
    %1442 = vmatpush2.msra.mxu0 0.0
    %1443 = vmatprep.subr.mxu0 0.0
    %1444 = vmatpush2.msra.mxu0 0.0
    %1445 = vmatprep.subr.mxu0 0.0
    %1446 = vmatpush2.msra.mxu0 0.0
    %1447 = vmatprep.subr.mxu0 0.0
    %1448 = vmatpush2.msra.mxu0 0.0
    %1449 = vmatprep.mubr.f32.mxu0 0.0
    %1450 = vmatmul.mubr.f32.gmra.mxu0 %v1357
    %v1451 = vpop.f32.mrf.mxu0
    %v1452 = vadd.f32 %v1383, %v1451
    %v1453 = vpop.f32.mrf.mxu0
    %1454 = vdwg.mxu0
    %1455 = vst [vmem:[%s7] sm:$0xff] %v1452
  $region37: #{gru_model_forward.1} parent=0 // pred_fallthru
    _
  // Predicated region
  $region38: #{gru_model_forward.1} parent=0 // pred_check
    _
  $region39: #{gru_model_forward.1} parent=0 // pred_check_branch
    %1457 = sbr.rel (0) target = $region41
  $region40: #{gru_model_forward.1} parent=0 // pred_region
    _
  $region41: #{gru_model_forward.1} parent=0 // pred_fallthru
    _
  // Predicated region
  $region42: #{gru_model_forward.1} parent=0 // pred_check
    _
  $region43: #{gru_model_forward.1} parent=0 // pred_check_branch
    %1459 = sbr.rel (0) target = $region45
  $region44: #{gru_model_forward.1} parent=0 // pred_region
    _
  $region45: #{gru_model_forward.1} parent=0 // pred_fallthru
    _

</llo_original>
